<compile_context>
chip_gen: v7x
topology: tpu7x:2x2x1
jax: 0.10.0
libtpu: 0.0.40
codegen_flags: <defaults>
</compile_context>

<pallas_src>
import math

import jax
import jax.numpy as jnp
import numpy as np
from jax.experimental import pallas as pl
from jax.experimental.pallas import tpu as pltpu

EPS = 1e-6                 # LayerNorm epsilon (nn.LayerNorm-style biased variance)
CDT = jnp.bfloat16         # MXU input dtype (f32 accumulation via preferred_element_type)


def _layer_norm(x, gamma, beta):
  mu = jnp.mean(x, axis=-1, keepdims=True)
  var = jnp.mean((x - mu) ** 2, axis=-1, keepdims=True)
  return (x - mu) * jax.lax.rsqrt(var + EPS) * gamma + beta


# ---------------------------------------------------------------------------
# Fused kernel: x -> x + MHA(LN1(x), bias) -> (+ FFN(LN2(.)))    (one batch row
# per grid step; all weights resident in VMEM)
# ---------------------------------------------------------------------------
def transformer_layer_kernel(x_ref, bias_ref, wqkv_ref, bqkv_ref, wo_ref, bo_ref,
                             ln1g_ref, ln1b_ref, w1_ref, b1_ref, w2_ref, b2_ref,
                             ln2g_ref, ln2b_ref, o_ref, ctx_ref):
  x = x_ref[0]                                         # (S, D)  float32
  D = x.shape[1]
  H = bias_ref.shape[1]
  dh = D // H
  scale = 1.0 / math.sqrt(dh)

  # ---------------- sublayer 1: pre-LN multi-head self-attention + residual
  xn = _layer_norm(x, ln1g_ref[...], ln1b_ref[...])

  # One lane-dense projection for all of Q, K, V (N = 3*H*dh = 3*D).
  qkv = (jnp.dot(xn.astype(CDT), wqkv_ref[...],
                 preferred_element_type=jnp.float32) + bqkv_ref[...])   # (S, 3D)
  q = qkv[:, :D] * scale                                # scale folded into q
  k = qkv[:, D:2 * D]
  v = qkv[:, 2 * D:]

  # Per-head attention core (matmuls here are inherently narrow; static unroll,
  # H is small).  TODO(synk): switch to lax.fori_loop for large head counts.
  for h in range(H):
    lo = h * dh
    qh = q[:, lo:lo + dh]                               # (S, dh)
    kh = k[:, lo:lo + dh]
    vh = v[:, lo:lo + dh]
    s = (jnp.dot(qh.astype(CDT), kh.T.astype(CDT),
                 preferred_element_type=jnp.float32) + bias_ref[0, h])  # (S, S)
    m = jnp.max(s, axis=-1, keepdims=True)
    p = jnp.exp(s - m)
    p = p * pl.reciprocal(jnp.sum(p, axis=-1, keepdims=True), approx=True)
    ctx_ref[:, lo:lo + dh] = jnp.dot(p.astype(CDT), vh.astype(CDT),
                                     preferred_element_type=jnp.float32)

  # Single lane-dense output projection over the concatenated heads.
  attn = (jnp.dot(ctx_ref[...].astype(CDT), wo_ref[...],
                  preferred_element_type=jnp.float32) + bo_ref[...])    # (S, D)
  x1 = x + attn                                         # residual (dropout = identity)

  # ---------------- sublayer 2: pre-LN feed-forward + residual
  xn2 = _layer_norm(x1, ln2g_ref[...], ln2b_ref[...])
  hdn = (jnp.dot(xn2.astype(CDT), w1_ref[...],
                 preferred_element_type=jnp.float32) + b1_ref[...])
  hdn = jnp.maximum(hdn, 0.0)                           # ReLU
  y = (jnp.dot(hdn.astype(CDT), w2_ref[...],
               preferred_element_type=jnp.float32) + b2_ref[...])
  o_ref[0] = x1 + y                                     # residual (dropout = identity)


# ---------------------------------------------------------------------------
# Wrapper: fuses per-head weights into lane-dense matrices and launches one
# pallas_call over the batch.
# ---------------------------------------------------------------------------
def transformer_layer(x, bias, p):
  B, S, D = x.shape
  H, _, dh = p["wq"].shape
  F = p["w1"].shape[1]

  # Fuse per-head projection weights (one-time, outside the kernel):
  #   wqkv[:, h*dh:(h+1)*dh]         == wq[h]
  #   wqkv[:, D + h*dh : ...]        == wk[h]       etc.
  wqkv = jnp.concatenate(
      [p["wq"].transpose(1, 0, 2).reshape(D, H * dh),
       p["wk"].transpose(1, 0, 2).reshape(D, H * dh),
       p["wv"].transpose(1, 0, 2).reshape(D, H * dh)], axis=1).astype(CDT)
  bqkv = jnp.concatenate(
      [p["bq"].reshape(1, H * dh),
       p["bk"].reshape(1, H * dh),
       p["bv"].reshape(1, H * dh)], axis=1)
  wo = p["wo"].reshape(H * dh, D).astype(CDT)           # concat over heads on axis 0
  w1 = p["w1"].astype(CDT)
  w2 = p["w2"].astype(CDT)

  full = lambda *shape: pl.BlockSpec(shape, lambda b: (0,) * len(shape))

  return pl.pallas_call(
      transformer_layer_kernel,
      out_shape=jax.ShapeDtypeStruct((B, S, D), jnp.float32),
      grid=(B,),
      in_specs=[
          pl.BlockSpec((1, S, D), lambda b: (b, 0, 0)),        # x
          pl.BlockSpec((1, H, S, S), lambda b: (b, 0, 0, 0)),  # attention bias
          full(D, 3 * D),   # wqkv (bf16)
          full(1, 3 * D),   # bqkv
          full(D, D),       # wo   (bf16)
          full(1, D),       # bo
          full(1, D),       # ln1 gamma
          full(1, D),       # ln1 beta
          full(D, F),       # w1   (bf16)
          full(1, F),       # b1
          full(F, D),       # w2   (bf16)
          full(1, D),       # b2
          full(1, D),       # ln2 gamma
          full(1, D),       # ln2 beta
      ],
      out_specs=pl.BlockSpec((1, S, D), lambda b: (b, 0, 0)),
      scratch_shapes=[pltpu.VMEM((S, D), jnp.float32)],        # per-head ctx slab
      compiler_params=pltpu.CompilerParams(
          dimension_semantics=("parallel",)),
  )(x, bias, wqkv, bqkv, wo, p["bo"], p["ln1_g"], p["ln1_b"],
    w1, p["b1"], w2, p["b2"], p["ln2_g"], p["ln2_b"])


# ---------------------------------------------------------------------------
# Pure-JAX (f32) reference for validation
# ---------------------------------------------------------------------------
def reference_layer(x, bias, p):
  def ln(v, g, b):
    mu = jnp.mean(v, axis=-1, keepdims=True)
    var = jnp.mean((v - mu) ** 2, axis=-1, keepdims=True)
    return (v - mu) * jax.lax.rsqrt(var + EPS) * g + b

  H, _, dh = p["wq"].shape
  scale = 1.0 / math.sqrt(dh)

  xn = ln(x, p["ln1_g"], p["ln1_b"])
  q = jnp.einsum("bsd,hdf->bhsf", xn, p["wq"]) + p["bq"][None]
  k = jnp.einsum("bsd,hdf->bhsf", xn, p["wk"]) + p["bk"][None]
  v = jnp.einsum("bsd,hdf->bhsf", xn, p["wv"]) + p["bv"][None]
  s = jnp.einsum("bhsf,bhtf->bhst", q, k) * scale + bias
  a = jax.nn.softmax(s, axis=-1)
  ctx = jnp.einsum("bhst,bhtf->bhsf", a, v)
  attn_out = jnp.einsum("bhsf,hfd->bsd", ctx, p["wo"]) + p["bo"]
  x1 = x + attn_out

  xn2 = ln(x1, p["ln2_g"], p["ln2_b"])
  h = jnp.maximum(xn2 @ p["w1"] + p["b1"], 0.0)
  y = h @ p["w2"] + p["b2"]
  return x1 + y


# ---------------------------------------------------------------------------
if __name__ == "__main__":
  B, S, D, H, F = 2, 8, 32, 4, 64
  dh = D // H

  key = jax.random.PRNGKey(0)
  keys = jax.random.split(key, 12)
  std = 0.02

  params = {
      "wq": std * jax.random.normal(keys[0], (H, D, dh), jnp.float32),
      "bq": std * jax.random.normal(keys[1], (H, 1, dh), jnp.float32),
      "wk": std * jax.random.normal(keys[2], (H, D, dh), jnp.float32),
      "bk": std * jax.random.normal(keys[3], (H, 1, dh), jnp.float32),
      "wv": std * jax.random.normal(keys[4], (H, D, dh), jnp.float32),
      "bv": std * jax.random.normal(keys[5], (H, 1, dh), jnp.float32),
      "wo": std * jax.random.normal(keys[6], (H, dh, D), jnp.float32),
      "bo": std * jax.random.normal(keys[7], (1, D), jnp.float32),
      "w1": std * jax.random.normal(keys[8], (D, F), jnp.float32),
      "b1": std * jax.random.normal(keys[9], (1, F), jnp.float32),
      "w2": std * jax.random.normal(keys[10], (F, D), jnp.float32),
      "b2": std * jax.random.normal(keys[11], (1, D), jnp.float32),
      "ln1_g": jnp.ones((1, D), jnp.float32),
      "ln1_b": jnp.zeros((1, D), jnp.float32),
      "ln2_g": jnp.ones((1, D), jnp.float32),
      "ln2_b": jnp.zeros((1, D), jnp.float32),
  }

  xkey, bkey = jax.random.split(jax.random.PRNGKey(42))
  x = jax.random.normal(xkey, (B, S, D), jnp.float32)
  attn_bias = 0.1 * jax.random.normal(bkey, (B, H, S, S), jnp.float32)

  out = jax.jit(transformer_layer)(x, attn_bias, params)
  out = jax.block_until_ready(out)

  ref = reference_layer(x, attn_bias, params)
  # bf16 MXU inputs + approx reciprocal -> slightly looser tolerance than pure f32.
  np.testing.assert_allclose(np.asarray(out), np.asarray(ref),
                             rtol=5e-3, atol=5e-3)
  print("KERNEL_OK")
</pallas_src>

<mosaic_0001>
module attributes {stable_mosaic.version = 11 : i64} {
  func.func @transformer_layer_kernel(%arg0: i32, %arg1: memref<1x8x32xf32, #tpu.memory_space<vmem>>, %arg2: memref<1x4x8x8xf32, #tpu.memory_space<vmem>>, %arg3: memref<32x96xbf16, #tpu.memory_space<vmem>>, %arg4: memref<1x96xf32, #tpu.memory_space<vmem>>, %arg5: memref<32x32xbf16, #tpu.memory_space<vmem>>, %arg6: memref<1x32xf32, #tpu.memory_space<vmem>>, %arg7: memref<1x32xf32, #tpu.memory_space<vmem>>, %arg8: memref<1x32xf32, #tpu.memory_space<vmem>>, %arg9: memref<32x64xbf16, #tpu.memory_space<vmem>>, %arg10: memref<1x64xf32, #tpu.memory_space<vmem>>, %arg11: memref<64x32xbf16, #tpu.memory_space<vmem>>, %arg12: memref<1x32xf32, #tpu.memory_space<vmem>>, %arg13: memref<1x32xf32, #tpu.memory_space<vmem>>, %arg14: memref<1x32xf32, #tpu.memory_space<vmem>>, %arg15: memref<1x8x32xf32, #tpu.memory_space<vmem>>, %arg16: memref<8x32xf32, #tpu.memory_space<vmem>>) attributes {dimension_semantics = [#tpu.dimension_semantics<parallel>], iteration_bounds = array<i64: 2>, scalar_prefetch = 0 : i64, scratch_operands = 1 : i64, tpu.core_type = #tpu.core_type<tc>, window_params = [{transform_indices = @transform_0, window_bounds = array<i64: 1, 8, 32>}, {transform_indices = @transform_1, window_bounds = array<i64: 1, 4, 8, 8>}, {pipeline_mode = #tpu.pipeline_mode<synchronous>, transform_indices = @transform_2, window_bounds = array<i64: 32, 96>}, {pipeline_mode = #tpu.pipeline_mode<synchronous>, transform_indices = @transform_3, window_bounds = array<i64: 1, 96>}, {pipeline_mode = #tpu.pipeline_mode<synchronous>, transform_indices = @transform_4, window_bounds = array<i64: 32, 32>}, {pipeline_mode = #tpu.pipeline_mode<synchronous>, transform_indices = @transform_5, window_bounds = array<i64: 1, 32>}, {pipeline_mode = #tpu.pipeline_mode<synchronous>, transform_indices = @transform_6, window_bounds = array<i64: 1, 32>}, {pipeline_mode = #tpu.pipeline_mode<synchronous>, transform_indices = @transform_7, window_bounds = array<i64: 1, 32>}, {pipeline_mode = #tpu.pipeline_mode<synchronous>, transform_indices = @transform_8, window_bounds = array<i64: 32, 64>}, {pipeline_mode = #tpu.pipeline_mode<synchronous>, transform_indices = @transform_9, window_bounds = array<i64: 1, 64>}, {pipeline_mode = #tpu.pipeline_mode<synchronous>, transform_indices = @transform_10, window_bounds = array<i64: 64, 32>}, {pipeline_mode = #tpu.pipeline_mode<synchronous>, transform_indices = @transform_11, window_bounds = array<i64: 1, 32>}, {pipeline_mode = #tpu.pipeline_mode<synchronous>, transform_indices = @transform_12, window_bounds = array<i64: 1, 32>}, {pipeline_mode = #tpu.pipeline_mode<synchronous>, transform_indices = @transform_13, window_bounds = array<i64: 1, 32>}, {transform_indices = @transform_14, window_bounds = array<i64: 1, 8, 32>}]} {
    %c0 = arith.constant 0 : index
    %c0_0 = arith.constant 0 : index
    %c0_1 = arith.constant 0 : index
    %0 = vector.load %arg1[%c0, %c0_0, %c0_1] : memref<1x8x32xf32, #tpu.memory_space<vmem>>, vector<1x8x32xf32>
    %1 = vector.shape_cast %0 : vector<1x8x32xf32> to vector<8x32xf32>
    %c0_2 = arith.constant 0 : index
    %c0_3 = arith.constant 0 : index
    %2 = vector.load %arg7[%c0_2, %c0_3] : memref<1x32xf32, #tpu.memory_space<vmem>>, vector<1x32xf32>
    %c0_4 = arith.constant 0 : index
    %c0_5 = arith.constant 0 : index
    %3 = vector.load %arg8[%c0_4, %c0_5] : memref<1x32xf32, #tpu.memory_space<vmem>>, vector<1x32xf32>
    %cst = arith.constant dense<0.000000e+00> : vector<8xf32>
    %4 = vector.multi_reduction <add>, %1, %cst [1] : vector<8x32xf32> to vector<8xf32>
    %5 = vector.shape_cast %4 : vector<8xf32> to vector<8x1xf32>
    %cst_6 = arith.constant 3.200000e+01 : f32
    %6 = vector.broadcast %cst_6 : f32 to vector<8x1xf32>
    %7 = arith.divf %5, %6 : vector<8x1xf32>
    %8 = vector.broadcast %7 : vector<8x1xf32> to vector<8x32xf32>
    %9 = arith.subf %1, %8 : vector<8x32xf32>
    %10 = arith.mulf %9, %9 : vector<8x32xf32>
    %cst_7 = arith.constant dense<0.000000e+00> : vector<8xf32>
    %11 = vector.multi_reduction <add>, %10, %cst_7 [1] : vector<8x32xf32> to vector<8xf32>
    %12 = vector.shape_cast %11 : vector<8xf32> to vector<8x1xf32>
    %cst_8 = arith.constant 3.200000e+01 : f32
    %13 = vector.broadcast %cst_8 : f32 to vector<8x1xf32>
    %14 = arith.divf %12, %13 : vector<8x1xf32>
    %15 = vector.broadcast %7 : vector<8x1xf32> to vector<8x32xf32>
    %16 = arith.subf %1, %15 : vector<8x32xf32>
    %cst_9 = arith.constant 9.99999997E-7 : f32
    %17 = vector.broadcast %cst_9 : f32 to vector<8x1xf32>
    %18 = arith.addf %14, %17 : vector<8x1xf32>
    %19 = math.rsqrt %18 : vector<8x1xf32>
    %20 = vector.broadcast %19 : vector<8x1xf32> to vector<8x32xf32>
    %21 = arith.mulf %16, %20 : vector<8x32xf32>
    %22 = vector.broadcast %2 : vector<1x32xf32> to vector<8x32xf32>
    %23 = arith.mulf %21, %22 : vector<8x32xf32>
    %24 = vector.broadcast %3 : vector<1x32xf32> to vector<8x32xf32>
    %25 = arith.addf %23, %24 : vector<8x32xf32>
    %26 = arith.truncf %25 : vector<8x32xf32> to vector<8x32xbf16>
    %c0_10 = arith.constant 0 : index
    %c0_11 = arith.constant 0 : index
    %27 = vector.load %arg3[%c0_10, %c0_11] : memref<32x96xbf16, #tpu.memory_space<vmem>>, vector<32x96xbf16>
    %cst_12 = arith.constant dense<0.000000e+00> : vector<8x96xf32>
    %28 = tpu.matmul %26, %27, %cst_12 {dimension_numbers = #tpu.dot_dimension_numbers<[1], [0], [0], [1], [0, 0, 1, 1], [], []>} : vector<8x32xbf16>, vector<32x96xbf16>, vector<8x96xf32> -> vector<8x96xf32>
    %c0_13 = arith.constant 0 : index
    %c0_14 = arith.constant 0 : index
    %29 = vector.load %arg4[%c0_13, %c0_14] : memref<1x96xf32, #tpu.memory_space<vmem>>, vector<1x96xf32>
    %30 = vector.broadcast %29 : vector<1x96xf32> to vector<8x96xf32>
    %31 = arith.addf %28, %30 : vector<8x96xf32>
    %32 = vector.extract_strided_slice %31 {offsets = [0, 0], sizes = [8, 32], strides = [1, 1]} : vector<8x96xf32> to vector<8x32xf32>
    %cst_15 = arith.constant 0.353553385 : f32
    %33 = vector.broadcast %cst_15 : f32 to vector<8x32xf32>
    %34 = arith.mulf %32, %33 : vector<8x32xf32>
    %35 = vector.extract_strided_slice %31 {offsets = [0, 32], sizes = [8, 32], strides = [1, 1]} : vector<8x96xf32> to vector<8x32xf32>
    %36 = vector.extract_strided_slice %31 {offsets = [0, 64], sizes = [8, 32], strides = [1, 1]} : vector<8x96xf32> to vector<8x32xf32>
    %37 = vector.extract_strided_slice %34 {offsets = [0, 0], sizes = [8, 8], strides = [1, 1]} : vector<8x32xf32> to vector<8x8xf32>
    %38 = vector.extract_strided_slice %35 {offsets = [0, 0], sizes = [8, 8], strides = [1, 1]} : vector<8x32xf32> to vector<8x8xf32>
    %39 = vector.extract_strided_slice %36 {offsets = [0, 0], sizes = [8, 8], strides = [1, 1]} : vector<8x32xf32> to vector<8x8xf32>
    %40 = arith.truncf %37 : vector<8x8xf32> to vector<8x8xbf16>
    %41 = tpu.transpose %38, [1, 0] : vector<8x8xf32> -> vector<8x8xf32>
    %42 = arith.truncf %41 : vector<8x8xf32> to vector<8x8xbf16>
    %cst_16 = arith.constant dense<0.000000e+00> : vector<8x8xf32>
    %43 = tpu.matmul %40, %42, %cst_16 {dimension_numbers = #tpu.dot_dimension_numbers<[1], [0], [0], [1], [0, 0, 1, 1], [], []>} : vector<8x8xbf16>, vector<8x8xbf16>, vector<8x8xf32> -> vector<8x8xf32>
    %c0_17 = arith.constant 0 : index
    %c0_18 = arith.constant 0 : index
    %c0_19 = arith.constant 0 : index
    %c0_20 = arith.constant 0 : index
    %44 = vector.load %arg2[%c0_17, %c0_18, %c0_19, %c0_20] : memref<1x4x8x8xf32, #tpu.memory_space<vmem>>, vector<1x1x8x8xf32>
    %45 = vector.shape_cast %44 : vector<1x1x8x8xf32> to vector<8x8xf32>
    %46 = arith.addf %43, %45 : vector<8x8xf32>
    %cst_21 = arith.constant dense<0xFF800000> : vector<8xf32>
    %47 = vector.multi_reduction <maximumf>, %46, %cst_21 [1] : vector<8x8xf32> to vector<8xf32>
    %48 = vector.shape_cast %47 : vector<8xf32> to vector<8x1xf32>
    %49 = vector.broadcast %48 : vector<8x1xf32> to vector<8x8xf32>
    %50 = arith.subf %46, %49 : vector<8x8xf32>
    %51 = math.exp %50 : vector<8x8xf32>
    %cst_22 = arith.constant dense<0.000000e+00> : vector<8xf32>
    %52 = vector.multi_reduction <add>, %51, %cst_22 [1] : vector<8x8xf32> to vector<8xf32>
    %53 = vector.shape_cast %52 : vector<8xf32> to vector<8x1xf32>
    %54 = tpu.reciprocal %53 {approx = true} : vector<8x1xf32> -> vector<8x1xf32>
    %55 = vector.broadcast %54 : vector<8x1xf32> to vector<8x8xf32>
    %56 = arith.mulf %51, %55 : vector<8x8xf32>
    %57 = arith.truncf %56 : vector<8x8xf32> to vector<8x8xbf16>
    %58 = arith.truncf %39 : vector<8x8xf32> to vector<8x8xbf16>
    %cst_23 = arith.constant dense<0.000000e+00> : vector<8x8xf32>
    %59 = tpu.matmul %57, %58, %cst_23 {dimension_numbers = #tpu.dot_dimension_numbers<[1], [0], [0], [1], [0, 0, 1, 1], [], []>} : vector<8x8xbf16>, vector<8x8xbf16>, vector<8x8xf32> -> vector<8x8xf32>
    %c0_24 = arith.constant 0 : index
    %c0_25 = arith.constant 0 : index
    %60 = vector.load %arg16[%c0_24, %c0_25] : memref<8x32xf32, #tpu.memory_space<vmem>>, vector<8x8xf32>
    tpu.vector_store %arg16[%c0_24, %c0_25], %59 {strides = array<i32>} : memref<8x32xf32, #tpu.memory_space<vmem>>, vector<8x8xf32>,
    %61 = vector.extract_strided_slice %34 {offsets = [0, 8], sizes = [8, 8], strides = [1, 1]} : vector<8x32xf32> to vector<8x8xf32>
    %62 = vector.extract_strided_slice %35 {offsets = [0, 8], sizes = [8, 8], strides = [1, 1]} : vector<8x32xf32> to vector<8x8xf32>
    %63 = vector.extract_strided_slice %36 {offsets = [0, 8], sizes = [8, 8], strides = [1, 1]} : vector<8x32xf32> to vector<8x8xf32>
    %64 = arith.truncf %61 : vector<8x8xf32> to vector<8x8xbf16>
    %65 = tpu.transpose %62, [1, 0] : vector<8x8xf32> -> vector<8x8xf32>
    %66 = arith.truncf %65 : vector<8x8xf32> to vector<8x8xbf16>
    %cst_26 = arith.constant dense<0.000000e+00> : vector<8x8xf32>
    %67 = tpu.matmul %64, %66, %cst_26 {dimension_numbers = #tpu.dot_dimension_numbers<[1], [0], [0], [1], [0, 0, 1, 1], [], []>} : vector<8x8xbf16>, vector<8x8xbf16>, vector<8x8xf32> -> vector<8x8xf32>
    %c0_27 = arith.constant 0 : index
    %c1 = arith.constant 1 : index
    %c0_28 = arith.constant 0 : index
    %c0_29 = arith.constant 0 : index
    %68 = vector.load %arg2[%c0_27, %c1, %c0_28, %c0_29] : memref<1x4x8x8xf32, #tpu.memory_space<vmem>>, vector<1x1x8x8xf32>
    %69 = vector.shape_cast %68 : vector<1x1x8x8xf32> to vector<8x8xf32>
    %70 = arith.addf %67, %69 : vector<8x8xf32>
    %cst_30 = arith.constant dense<0xFF800000> : vector<8xf32>
    %71 = vector.multi_reduction <maximumf>, %70, %cst_30 [1] : vector<8x8xf32> to vector<8xf32>
    %72 = vector.shape_cast %71 : vector<8xf32> to vector<8x1xf32>
    %73 = vector.broadcast %72 : vector<8x1xf32> to vector<8x8xf32>
    %74 = arith.subf %70, %73 : vector<8x8xf32>
    %75 = math.exp %74 : vector<8x8xf32>
    %cst_31 = arith.constant dense<0.000000e+00> : vector<8xf32>
    %76 = vector.multi_reduction <add>, %75, %cst_31 [1] : vector<8x8xf32> to vector<8xf32>
    %77 = vector.shape_cast %76 : vector<8xf32> to vector<8x1xf32>
    %78 = tpu.reciprocal %77 {approx = true} : vector<8x1xf32> -> vector<8x1xf32>
    %79 = vector.broadcast %78 : vector<8x1xf32> to vector<8x8xf32>
    %80 = arith.mulf %75, %79 : vector<8x8xf32>
    %81 = arith.truncf %80 : vector<8x8xf32> to vector<8x8xbf16>
    %82 = arith.truncf %63 : vector<8x8xf32> to vector<8x8xbf16>
    %cst_32 = arith.constant dense<0.000000e+00> : vector<8x8xf32>
    %83 = tpu.matmul %81, %82, %cst_32 {dimension_numbers = #tpu.dot_dimension_numbers<[1], [0], [0], [1], [0, 0, 1, 1], [], []>} : vector<8x8xbf16>, vector<8x8xbf16>, vector<8x8xf32> -> vector<8x8xf32>
    %c0_33 = arith.constant 0 : index
    %c8 = arith.constant 8 : index
    %84 = vector.load %arg16[%c0_33, %c8] : memref<8x32xf32, #tpu.memory_space<vmem>>, vector<8x8xf32>
    tpu.vector_store %arg16[%c0_33, %c8], %83 {strides = array<i32>} : memref<8x32xf32, #tpu.memory_space<vmem>>, vector<8x8xf32>,
    %85 = vector.extract_strided_slice %34 {offsets = [0, 16], sizes = [8, 8], strides = [1, 1]} : vector<8x32xf32> to vector<8x8xf32>
    %86 = vector.extract_strided_slice %35 {offsets = [0, 16], sizes = [8, 8], strides = [1, 1]} : vector<8x32xf32> to vector<8x8xf32>
    %87 = vector.extract_strided_slice %36 {offsets = [0, 16], sizes = [8, 8], strides = [1, 1]} : vector<8x32xf32> to vector<8x8xf32>
    %88 = arith.truncf %85 : vector<8x8xf32> to vector<8x8xbf16>
    %89 = tpu.transpose %86, [1, 0] : vector<8x8xf32> -> vector<8x8xf32>
    %90 = arith.truncf %89 : vector<8x8xf32> to vector<8x8xbf16>
    %cst_34 = arith.constant dense<0.000000e+00> : vector<8x8xf32>
    %91 = tpu.matmul %88, %90, %cst_34 {dimension_numbers = #tpu.dot_dimension_numbers<[1], [0], [0], [1], [0, 0, 1, 1], [], []>} : vector<8x8xbf16>, vector<8x8xbf16>, vector<8x8xf32> -> vector<8x8xf32>
    %c0_35 = arith.constant 0 : index
    %c2 = arith.constant 2 : index
    %c0_36 = arith.constant 0 : index
    %c0_37 = arith.constant 0 : index
    %92 = vector.load %arg2[%c0_35, %c2, %c0_36, %c0_37] : memref<1x4x8x8xf32, #tpu.memory_space<vmem>>, vector<1x1x8x8xf32>
    %93 = vector.shape_cast %92 : vector<1x1x8x8xf32> to vector<8x8xf32>
    %94 = arith.addf %91, %93 : vector<8x8xf32>
    %cst_38 = arith.constant dense<0xFF800000> : vector<8xf32>
    %95 = vector.multi_reduction <maximumf>, %94, %cst_38 [1] : vector<8x8xf32> to vector<8xf32>
    %96 = vector.shape_cast %95 : vector<8xf32> to vector<8x1xf32>
    %97 = vector.broadcast %96 : vector<8x1xf32> to vector<8x8xf32>
    %98 = arith.subf %94, %97 : vector<8x8xf32>
    %99 = math.exp %98 : vector<8x8xf32>
    %cst_39 = arith.constant dense<0.000000e+00> : vector<8xf32>
    %100 = vector.multi_reduction <add>, %99, %cst_39 [1] : vector<8x8xf32> to vector<8xf32>
    %101 = vector.shape_cast %100 : vector<8xf32> to vector<8x1xf32>
    %102 = tpu.reciprocal %101 {approx = true} : vector<8x1xf32> -> vector<8x1xf32>
    %103 = vector.broadcast %102 : vector<8x1xf32> to vector<8x8xf32>
    %104 = arith.mulf %99, %103 : vector<8x8xf32>
    %105 = arith.truncf %104 : vector<8x8xf32> to vector<8x8xbf16>
    %106 = arith.truncf %87 : vector<8x8xf32> to vector<8x8xbf16>
    %cst_40 = arith.constant dense<0.000000e+00> : vector<8x8xf32>
    %107 = tpu.matmul %105, %106, %cst_40 {dimension_numbers = #tpu.dot_dimension_numbers<[1], [0], [0], [1], [0, 0, 1, 1], [], []>} : vector<8x8xbf16>, vector<8x8xbf16>, vector<8x8xf32> -> vector<8x8xf32>
    %c0_41 = arith.constant 0 : index
    %c16 = arith.constant 16 : index
    %108 = vector.load %arg16[%c0_41, %c16] : memref<8x32xf32, #tpu.memory_space<vmem>>, vector<8x8xf32>
    tpu.vector_store %arg16[%c0_41, %c16], %107 {strides = array<i32>} : memref<8x32xf32, #tpu.memory_space<vmem>>, vector<8x8xf32>,
    %109 = vector.extract_strided_slice %34 {offsets = [0, 24], sizes = [8, 8], strides = [1, 1]} : vector<8x32xf32> to vector<8x8xf32>
    %110 = vector.extract_strided_slice %35 {offsets = [0, 24], sizes = [8, 8], strides = [1, 1]} : vector<8x32xf32> to vector<8x8xf32>
    %111 = vector.extract_strided_slice %36 {offsets = [0, 24], sizes = [8, 8], strides = [1, 1]} : vector<8x32xf32> to vector<8x8xf32>
    %112 = arith.truncf %109 : vector<8x8xf32> to vector<8x8xbf16>
    %113 = tpu.transpose %110, [1, 0] : vector<8x8xf32> -> vector<8x8xf32>
    %114 = arith.truncf %113 : vector<8x8xf32> to vector<8x8xbf16>
    %cst_42 = arith.constant dense<0.000000e+00> : vector<8x8xf32>
    %115 = tpu.matmul %112, %114, %cst_42 {dimension_numbers = #tpu.dot_dimension_numbers<[1], [0], [0], [1], [0, 0, 1, 1], [], []>} : vector<8x8xbf16>, vector<8x8xbf16>, vector<8x8xf32> -> vector<8x8xf32>
    %c0_43 = arith.constant 0 : index
    %c3 = arith.constant 3 : index
    %c0_44 = arith.constant 0 : index
    %c0_45 = arith.constant 0 : index
    %116 = vector.load %arg2[%c0_43, %c3, %c0_44, %c0_45] : memref<1x4x8x8xf32, #tpu.memory_space<vmem>>, vector<1x1x8x8xf32>
    %117 = vector.shape_cast %116 : vector<1x1x8x8xf32> to vector<8x8xf32>
    %118 = arith.addf %115, %117 : vector<8x8xf32>
    %cst_46 = arith.constant dense<0xFF800000> : vector<8xf32>
    %119 = vector.multi_reduction <maximumf>, %118, %cst_46 [1] : vector<8x8xf32> to vector<8xf32>
    %120 = vector.shape_cast %119 : vector<8xf32> to vector<8x1xf32>
    %121 = vector.broadcast %120 : vector<8x1xf32> to vector<8x8xf32>
    %122 = arith.subf %118, %121 : vector<8x8xf32>
    %123 = math.exp %122 : vector<8x8xf32>
    %cst_47 = arith.constant dense<0.000000e+00> : vector<8xf32>
    %124 = vector.multi_reduction <add>, %123, %cst_47 [1] : vector<8x8xf32> to vector<8xf32>
    %125 = vector.shape_cast %124 : vector<8xf32> to vector<8x1xf32>
    %126 = tpu.reciprocal %125 {approx = true} : vector<8x1xf32> -> vector<8x1xf32>
    %127 = vector.broadcast %126 : vector<8x1xf32> to vector<8x8xf32>
    %128 = arith.mulf %123, %127 : vector<8x8xf32>
    %129 = arith.truncf %128 : vector<8x8xf32> to vector<8x8xbf16>
    %130 = arith.truncf %111 : vector<8x8xf32> to vector<8x8xbf16>
    %cst_48 = arith.constant dense<0.000000e+00> : vector<8x8xf32>
    %131 = tpu.matmul %129, %130, %cst_48 {dimension_numbers = #tpu.dot_dimension_numbers<[1], [0], [0], [1], [0, 0, 1, 1], [], []>} : vector<8x8xbf16>, vector<8x8xbf16>, vector<8x8xf32> -> vector<8x8xf32>
    %c0_49 = arith.constant 0 : index
    %c24 = arith.constant 24 : index
    %132 = vector.load %arg16[%c0_49, %c24] : memref<8x32xf32, #tpu.memory_space<vmem>>, vector<8x8xf32>
    tpu.vector_store %arg16[%c0_49, %c24], %131 {strides = array<i32>} : memref<8x32xf32, #tpu.memory_space<vmem>>, vector<8x8xf32>,
    %c0_50 = arith.constant 0 : index
    %c0_51 = arith.constant 0 : index
    %133 = vector.load %arg16[%c0_50, %c0_51] : memref<8x32xf32, #tpu.memory_space<vmem>>, vector<8x32xf32>
    %134 = arith.truncf %133 : vector<8x32xf32> to vector<8x32xbf16>
    %c0_52 = arith.constant 0 : index
    %c0_53 = arith.constant 0 : index
    %135 = vector.load %arg5[%c0_52, %c0_53] : memref<32x32xbf16, #tpu.memory_space<vmem>>, vector<32x32xbf16>
    %cst_54 = arith.constant dense<0.000000e+00> : vector<8x32xf32>
    %136 = tpu.matmul %134, %135, %cst_54 {dimension_numbers = #tpu.dot_dimension_numbers<[1], [0], [0], [1], [0, 0, 1, 1], [], []>} : vector<8x32xbf16>, vector<32x32xbf16>, vector<8x32xf32> -> vector<8x32xf32>
    %c0_55 = arith.constant 0 : index
    %c0_56 = arith.constant 0 : index
    %137 = vector.load %arg6[%c0_55, %c0_56] : memref<1x32xf32, #tpu.memory_space<vmem>>, vector<1x32xf32>
    %138 = vector.broadcast %137 : vector<1x32xf32> to vector<8x32xf32>
    %139 = arith.addf %136, %138 : vector<8x32xf32>
    %140 = arith.addf %1, %139 : vector<8x32xf32>
    %c0_57 = arith.constant 0 : index
    %c0_58 = arith.constant 0 : index
    %141 = vector.load %arg13[%c0_57, %c0_58] : memref<1x32xf32, #tpu.memory_space<vmem>>, vector<1x32xf32>
    %c0_59 = arith.constant 0 : index
    %c0_60 = arith.constant 0 : index
    %142 = vector.load %arg14[%c0_59, %c0_60] : memref<1x32xf32, #tpu.memory_space<vmem>>, vector<1x32xf32>
    %cst_61 = arith.constant dense<0.000000e+00> : vector<8xf32>
    %143 = vector.multi_reduction <add>, %140, %cst_61 [1] : vector<8x32xf32> to vector<8xf32>
    %144 = vector.shape_cast %143 : vector<8xf32> to vector<8x1xf32>
    %cst_62 = arith.constant 3.200000e+01 : f32
    %145 = vector.broadcast %cst_62 : f32 to vector<8x1xf32>
    %146 = arith.divf %144, %145 : vector<8x1xf32>
    %147 = vector.broadcast %146 : vector<8x1xf32> to vector<8x32xf32>
    %148 = arith.subf %140, %147 : vector<8x32xf32>
    %149 = arith.mulf %148, %148 : vector<8x32xf32>
    %cst_63 = arith.constant dense<0.000000e+00> : vector<8xf32>
    %150 = vector.multi_reduction <add>, %149, %cst_63 [1] : vector<8x32xf32> to vector<8xf32>
    %151 = vector.shape_cast %150 : vector<8xf32> to vector<8x1xf32>
    %cst_64 = arith.constant 3.200000e+01 : f32
    %152 = vector.broadcast %cst_64 : f32 to vector<8x1xf32>
    %153 = arith.divf %151, %152 : vector<8x1xf32>
    %154 = vector.broadcast %146 : vector<8x1xf32> to vector<8x32xf32>
    %155 = arith.subf %140, %154 : vector<8x32xf32>
    %cst_65 = arith.constant 9.99999997E-7 : f32
    %156 = vector.broadcast %cst_65 : f32 to vector<8x1xf32>
    %157 = arith.addf %153, %156 : vector<8x1xf32>
    %158 = math.rsqrt %157 : vector<8x1xf32>
    %159 = vector.broadcast %158 : vector<8x1xf32> to vector<8x32xf32>
    %160 = arith.mulf %155, %159 : vector<8x32xf32>
    %161 = vector.broadcast %141 : vector<1x32xf32> to vector<8x32xf32>
    %162 = arith.mulf %160, %161 : vector<8x32xf32>
    %163 = vector.broadcast %142 : vector<1x32xf32> to vector<8x32xf32>
    %164 = arith.addf %162, %163 : vector<8x32xf32>
    %165 = arith.truncf %164 : vector<8x32xf32> to vector<8x32xbf16>
    %c0_66 = arith.constant 0 : index
    %c0_67 = arith.constant 0 : index
    %166 = vector.load %arg9[%c0_66, %c0_67] : memref<32x64xbf16, #tpu.memory_space<vmem>>, vector<32x64xbf16>
    %cst_68 = arith.constant dense<0.000000e+00> : vector<8x64xf32>
    %167 = tpu.matmul %165, %166, %cst_68 {dimension_numbers = #tpu.dot_dimension_numbers<[1], [0], [0], [1], [0, 0, 1, 1], [], []>} : vector<8x32xbf16>, vector<32x64xbf16>, vector<8x64xf32> -> vector<8x64xf32>
    %c0_69 = arith.constant 0 : index
    %c0_70 = arith.constant 0 : index
    %168 = vector.load %arg10[%c0_69, %c0_70] : memref<1x64xf32, #tpu.memory_space<vmem>>, vector<1x64xf32>
    %169 = vector.broadcast %168 : vector<1x64xf32> to vector<8x64xf32>
    %170 = arith.addf %167, %169 : vector<8x64xf32>
    %cst_71 = arith.constant 0.000000e+00 : f32
    %171 = vector.broadcast %cst_71 : f32 to vector<8x64xf32>
    %172 = arith.maximumf %170, %171 : vector<8x64xf32>
    %173 = arith.truncf %172 : vector<8x64xf32> to vector<8x64xbf16>
    %c0_72 = arith.constant 0 : index
    %c0_73 = arith.constant 0 : index
    %174 = vector.load %arg11[%c0_72, %c0_73] : memref<64x32xbf16, #tpu.memory_space<vmem>>, vector<64x32xbf16>
    %cst_74 = arith.constant dense<0.000000e+00> : vector<8x32xf32>
    %175 = tpu.matmul %173, %174, %cst_74 {dimension_numbers = #tpu.dot_dimension_numbers<[1], [0], [0], [1], [0, 0, 1, 1], [], []>} : vector<8x64xbf16>, vector<64x32xbf16>, vector<8x32xf32> -> vector<8x32xf32>
    %c0_75 = arith.constant 0 : index
    %c0_76 = arith.constant 0 : index
    %176 = vector.load %arg12[%c0_75, %c0_76] : memref<1x32xf32, #tpu.memory_space<vmem>>, vector<1x32xf32>
    %177 = vector.broadcast %176 : vector<1x32xf32> to vector<8x32xf32>
    %178 = arith.addf %175, %177 : vector<8x32xf32>
    %179 = arith.addf %140, %178 : vector<8x32xf32>
    %c0_77 = arith.constant 0 : index
    %c0_78 = arith.constant 0 : index
    %c0_79 = arith.constant 0 : index
    %180 = vector.load %arg15[%c0_77, %c0_78, %c0_79] : memref<1x8x32xf32, #tpu.memory_space<vmem>>, vector<1x8x32xf32>
    %181 = vector.shape_cast %180 : vector<1x8x32xf32> to vector<8x32xf32>
    %182 = vector.shape_cast %179 : vector<8x32xf32> to vector<1x8x32xf32>
    tpu.vector_store %arg15[%c0_77, %c0_78, %c0_79], %182 {strides = array<i32>} : memref<1x8x32xf32, #tpu.memory_space<vmem>>, vector<1x8x32xf32>,
    return
  }
  func.func @transform_0(%arg0: i32) -> (i32, i32, i32) {
    %c0_i32 = arith.constant 0 : i32
    %c0_i32_0 = arith.constant 0 : i32
    %c0_i32_1 = arith.constant 0 : i32
    return %arg0, %c0_i32, %c0_i32_0 : i32, i32, i32
  }
  func.func @transform_1(%arg0: i32) -> (i32, i32, i32, i32) {
    %c0_i32 = arith.constant 0 : i32
    %c0_i32_0 = arith.constant 0 : i32
    %c0_i32_1 = arith.constant 0 : i32
    %c0_i32_2 = arith.constant 0 : i32
    return %arg0, %c0_i32, %c0_i32_0, %c0_i32_1 : i32, i32, i32, i32
  }
  func.func @transform_2(%arg0: i32) -> (i32, i32) {
    %c0_i32 = arith.constant 0 : i32
    %c0_i32_0 = arith.constant 0 : i32
    %c0_i32_1 = arith.constant 0 : i32
    return %c0_i32, %c0_i32_0 : i32, i32
  }
  func.func @transform_3(%arg0: i32) -> (i32, i32) {
    %c0_i32 = arith.constant 0 : i32
    %c0_i32_0 = arith.constant 0 : i32
    %c0_i32_1 = arith.constant 0 : i32
    return %c0_i32, %c0_i32_0 : i32, i32
  }
  func.func @transform_4(%arg0: i32) -> (i32, i32) {
    %c0_i32 = arith.constant 0 : i32
    %c0_i32_0 = arith.constant 0 : i32
    %c0_i32_1 = arith.constant 0 : i32
    return %c0_i32, %c0_i32_0 : i32, i32
  }
  func.func @transform_5(%arg0: i32) -> (i32, i32) {
    %c0_i32 = arith.constant 0 : i32
    %c0_i32_0 = arith.constant 0 : i32
    %c0_i32_1 = arith.constant 0 : i32
    return %c0_i32, %c0_i32_0 : i32, i32
  }
  func.func @transform_6(%arg0: i32) -> (i32, i32) {
    %c0_i32 = arith.constant 0 : i32
    %c0_i32_0 = arith.constant 0 : i32
    %c0_i32_1 = arith.constant 0 : i32
    return %c0_i32, %c0_i32_0 : i32, i32
  }
  func.func @transform_7(%arg0: i32) -> (i32, i32) {
    %c0_i32 = arith.constant 0 : i32
    %c0_i32_0 = arith.constant 0 : i32
    %c0_i32_1 = arith.constant 0 : i32
    return %c0_i32, %c0_i32_0 : i32, i32
  }
  func.func @transform_8(%arg0: i32) -> (i32, i32) {
    %c0_i32 = arith.constant 0 : i32
    %c0_i32_0 = arith.constant 0 : i32
    %c0_i32_1 = arith.constant 0 : i32
    return %c0_i32, %c0_i32_0 : i32, i32
  }
  func.func @transform_9(%arg0: i32) -> (i32, i32) {
    %c0_i32 = arith.constant 0 : i32
    %c0_i32_0 = arith.constant 0 : i32
    %c0_i32_1 = arith.constant 0 : i32
    return %c0_i32, %c0_i32_0 : i32, i32
  }
  func.func @transform_10(%arg0: i32) -> (i32, i32) {
    %c0_i32 = arith.constant 0 : i32
    %c0_i32_0 = arith.constant 0 : i32
    %c0_i32_1 = arith.constant 0 : i32
    return %c0_i32, %c0_i32_0 : i32, i32
  }
  func.func @transform_11(%arg0: i32) -> (i32, i32) {
    %c0_i32 = arith.constant 0 : i32
    %c0_i32_0 = arith.constant 0 : i32
    %c0_i32_1 = arith.constant 0 : i32
    return %c0_i32, %c0_i32_0 : i32, i32
  }
  func.func @transform_12(%arg0: i32) -> (i32, i32) {
    %c0_i32 = arith.constant 0 : i32
    %c0_i32_0 = arith.constant 0 : i32
    %c0_i32_1 = arith.constant 0 : i32
    return %c0_i32, %c0_i32_0 : i32, i32
  }
  func.func @transform_13(%arg0: i32) -> (i32, i32) {
    %c0_i32 = arith.constant 0 : i32
    %c0_i32_0 = arith.constant 0 : i32
    %c0_i32_1 = arith.constant 0 : i32
    return %c0_i32, %c0_i32_0 : i32, i32
  }
  func.func @transform_14(%arg0: i32) -> (i32, i32, i32) {
    %c0_i32 = arith.constant 0 : i32
    %c0_i32_0 = arith.constant 0 : i32
    %c0_i32_1 = arith.constant 0 : i32
    return %arg0, %c0_i32, %c0_i32_0 : i32, i32, i32
  }
}

</mosaic_0001>

<llo_original>
// kernel: transformer_layer.1
$region0: #{transformer_layer.1}
  #allocation0 [shape = 'u32[]', space=smem, size = 0x4, offset = 0x4, fixed_abs, tag = 'smem constant byte address 0x4 - core index']
  #allocation1 [shape = 'u32[144,128]{1,0:T(1,128)}', space=vmem, size = 0x12000, scoped, tag = 'internal scratch']
  #allocation2 [shape = 'f32[8,32]{1,0:T(8,128)}', space=vmem, size = 0x1000, scoped, tag = 'scratch operand']
  %s0 = inlined_call_operand.vmem [shape: f32[2,8,32], index: 0, kind: input, shape index: {}]
  %s1 = inlined_call_operand.vmem [shape: f32[2,4,8,8], index: 1, kind: input, shape index: {}]
  %s2 = inlined_call_operand.vmem [shape: bf16[32,96], index: 2, kind: input, shape index: {}]
  %s3 = inlined_call_operand.vmem [shape: f32[1,96], index: 3, kind: input, shape index: {}]
  %s4 = inlined_call_operand.vmem [shape: bf16[32,32], index: 4, kind: input, shape index: {}]
  %s5 = inlined_call_operand.vmem [shape: f32[1,32], index: 5, kind: input, shape index: {}]
  %s6 = inlined_call_operand.vmem [shape: f32[1,32], index: 6, kind: input, shape index: {}]
  %s7 = inlined_call_operand.vmem [shape: f32[1,32], index: 7, kind: input, shape index: {}]
  %s8 = inlined_call_operand.vmem [shape: bf16[32,64], index: 8, kind: input, shape index: {}]
  %s9 = inlined_call_operand.vmem [shape: f32[1,64], index: 9, kind: input, shape index: {}]
  %s10 = inlined_call_operand.vmem [shape: bf16[64,32], index: 10, kind: input, shape index: {}]
  %s11 = inlined_call_operand.vmem [shape: f32[1,32], index: 11, kind: input, shape index: {}]
  %s12 = inlined_call_operand.vmem [shape: f32[1,32], index: 12, kind: input, shape index: {}]
  %s13 = inlined_call_operand.vmem [shape: f32[1,32], index: 13, kind: input, shape index: {}]
  %s14 = inlined_call_operand.hbm [shape: f32[2,8,32], index: 14, kind: output, shape index: {}]
  %s15 = sld [smem:[#allocation0]]
  $region89: #{transformer_layer.1} parent=0
    _
  %s17 = ssub.s32 1, %s15
  %s18 = scalar_select 0, %s17, %s15
  $region1: #{transformer_layer.1} parent=0
    #allocation3 [shape = 'u8[8192]{0}', space=vmem, size = 0x2000, scoped, tag = 'output window, operand 0']
    #allocation4 [shape = 's32[2]{0}', space=sflag, size = 0x8, scoped, tag = 'scoped memory for transformer_layer.1']
    %19 = vsyncpa [#allocation4], 0
    %s20 = scalar_lea.sflag [#allocation4], 1
    %21 = vsyncpa %s20, 0
    loop: start=0, step=1, limit=4
    $region2: #{transformer_layer.1} parent=1 // loop_pre_header
      _
    $region3: #{transformer_layer.1} parent=1 // loop_header
      %s23 = sphi 0, %s27
      %p24 = scmp.ge.s32.totalorder %s23, 4
      %s33 = sphi 0, %s35
      %s36 = sphi 0, %s33
      %s37 = sphi 0, %s36
      %s53 = sphi 0, %s37
      %s59 = sphi 0, %s61
      %s62 = sphi 0, %s59
      %s63 = sphi 0, %s62
      %s79 = sphi 0, %s63
      %s83 = sphi 0, %s83
      %s85 = sphi 0, %s83
      %s86 = sphi 0, %s85
      %s100 = sphi 0, %s86
      %s104 = sphi 0, %s104
      %s106 = sphi 0, %s104
      %s107 = sphi 0, %s106
      %s121 = sphi 0, %s107
      %s125 = sphi 0, %s125
      %s127 = sphi 0, %s125
      %s128 = sphi 0, %s127
      %s142 = sphi 0, %s128
      %s146 = sphi 0, %s146
      %s148 = sphi 0, %s146
      %s149 = sphi 0, %s148
      %s163 = sphi 0, %s149
      %s167 = sphi 0, %s167
      %s169 = sphi 0, %s167
      %s170 = sphi 0, %s169
      %s184 = sphi 0, %s170
      %s188 = sphi 0, %s188
      %s190 = sphi 0, %s188
      %s191 = sphi 0, %s190
      %s205 = sphi 0, %s191
      %s209 = sphi 0, %s209
      %s211 = sphi 0, %s209
      %s212 = sphi 0, %s211
      %s226 = sphi 0, %s212
      %s230 = sphi 0, %s230
      %s232 = sphi 0, %s230
      %s233 = sphi 0, %s232
      %s247 = sphi 0, %s233
      %s251 = sphi 0, %s251
      %s253 = sphi 0, %s251
      %s254 = sphi 0, %s253
      %s268 = sphi 0, %s254
      %s272 = sphi 0, %s272
      %s274 = sphi 0, %s272
      %s275 = sphi 0, %s274
      %s289 = sphi 0, %s275
      %s293 = sphi 0, %s293
      %s295 = sphi 0, %s293
      %s296 = sphi 0, %s295
      %s310 = sphi 0, %s296
      %s314 = sphi 0, %s314
      %s316 = sphi 0, %s314
      %s317 = sphi 0, %s316
      %s331 = sphi 0, %s317
      %s337 = sphi 0, %s339
      %s340 = sphi 0, %s337
      %s341 = sphi 0, %s340
      %s357 = sphi 0, %s341
    $region4: #{transformer_layer.1} parent=1 // loop_header_branch
      %26 = sbr.rel (%p24) target = $region8
    $region5: #{transformer_layer.1} parent=1 // loop_body
      %s28 = ssub.s32 %s23, 1
      %s29 = ssub.s32 %s23, 2
      %s30 = sadd.s32 %s23, 1
      %s31 = ssub.s32 %s23, %s30
      %p32 = scmp.eq.s32.totalorder %s31, 0
      %s34 = sadd.s32 %s33, 1
      %s35 = scalar_select %p32, %s33, %s34
      %p38 = pneg %p32
      %p39 = scmp.eq.s32.totalorder %s23, 1
      %p40 = por %p38, %p39
      %p41 = scmp.ne.s32.totalorder %s33, %s36
      %p42 = scmp.eq.s32.totalorder %s23, 0
      %p43 = por %p41, %p42
      %p44 = scmp.ne.s32.totalorder %s33, %s36
      %p45 = scmp.eq.s32.totalorder %s28, 1
      %p46 = por %p44, %p45
      %p47 = scmp.ne.s32.totalorder %s36, %s37
      %p48 = scmp.eq.s32.totalorder %s28, 0
      %p49 = por %p47, %p48
      %p50 = scmp.ne.s32.totalorder %s36, %s37
      %p51 = scmp.eq.s32.totalorder %s29, 1
      %p52 = por %p50, %p51
      %p54 = scmp.ne.s32.totalorder %s37, %s53
      %p55 = scmp.eq.s32.totalorder %s29, 0
      %p56 = por %p54, %p55
      %s57 = ssub.s32 %s23, %s30
      %p58 = scmp.eq.s32.totalorder %s57, 0
      %s60 = sadd.s32 %s59, 1
      %s61 = scalar_select %p58, %s59, %s60
      %p64 = pneg %p58
      %p65 = scmp.eq.s32.totalorder %s23, 1
      %p66 = por %p64, %p65
      %p67 = scmp.ne.s32.totalorder %s59, %s62
      %p68 = scmp.eq.s32.totalorder %s23, 0
      %p69 = por %p67, %p68
      %p70 = scmp.ne.s32.totalorder %s59, %s62
      %p71 = scmp.eq.s32.totalorder %s28, 1
      %p72 = por %p70, %p71
      %p73 = scmp.ne.s32.totalorder %s62, %s63
      %p74 = scmp.eq.s32.totalorder %s28, 0
      %p75 = por %p73, %p74
      %p76 = scmp.ne.s32.totalorder %s62, %s63
      %p77 = scmp.eq.s32.totalorder %s29, 1
      %p78 = por %p76, %p77
      %p80 = scmp.ne.s32.totalorder %s63, %s79
      %p81 = scmp.eq.s32.totalorder %s29, 0
      %p82 = por %p80, %p81
      %s84 = sadd.s32 %s83, 1
      %p87 = scmp.eq.s32.totalorder %s23, 1
      %p88 = scmp.ne.s32.totalorder %s83, %s85
      %p89 = scmp.eq.s32.totalorder %s23, 0
      %p90 = por %p88, %p89
      %p91 = scmp.ne.s32.totalorder %s83, %s85
      %p92 = scmp.eq.s32.totalorder %s28, 1
      %p93 = por %p91, %p92
      %p94 = scmp.ne.s32.totalorder %s85, %s86
      %p95 = scmp.eq.s32.totalorder %s28, 0
      %p96 = por %p94, %p95
      %p97 = scmp.ne.s32.totalorder %s85, %s86
      %p98 = scmp.eq.s32.totalorder %s29, 1
      %p99 = por %p97, %p98
      %p101 = scmp.ne.s32.totalorder %s86, %s100
      %p102 = scmp.eq.s32.totalorder %s29, 0
      %p103 = por %p101, %p102
      %s105 = sadd.s32 %s104, 1
      %p108 = scmp.eq.s32.totalorder %s23, 1
      %p109 = scmp.ne.s32.totalorder %s104, %s106
      %p110 = scmp.eq.s32.totalorder %s23, 0
      %p111 = por %p109, %p110
      %p112 = scmp.ne.s32.totalorder %s104, %s106
      %p113 = scmp.eq.s32.totalorder %s28, 1
      %p114 = por %p112, %p113
      %p115 = scmp.ne.s32.totalorder %s106, %s107
      %p116 = scmp.eq.s32.totalorder %s28, 0
      %p117 = por %p115, %p116
      %p118 = scmp.ne.s32.totalorder %s106, %s107
      %p119 = scmp.eq.s32.totalorder %s29, 1
      %p120 = por %p118, %p119
      %p122 = scmp.ne.s32.totalorder %s107, %s121
      %p123 = scmp.eq.s32.totalorder %s29, 0
      %p124 = por %p122, %p123
      %s126 = sadd.s32 %s125, 1
      %p129 = scmp.eq.s32.totalorder %s23, 1
      %p130 = scmp.ne.s32.totalorder %s125, %s127
      %p131 = scmp.eq.s32.totalorder %s23, 0
      %p132 = por %p130, %p131
      %p133 = scmp.ne.s32.totalorder %s125, %s127
      %p134 = scmp.eq.s32.totalorder %s28, 1
      %p135 = por %p133, %p134
      %p136 = scmp.ne.s32.totalorder %s127, %s128
      %p137 = scmp.eq.s32.totalorder %s28, 0
      %p138 = por %p136, %p137
      %p139 = scmp.ne.s32.totalorder %s127, %s128
      %p140 = scmp.eq.s32.totalorder %s29, 1
      %p141 = por %p139, %p140
      %p143 = scmp.ne.s32.totalorder %s128, %s142
      %p144 = scmp.eq.s32.totalorder %s29, 0
      %p145 = por %p143, %p144
      %s147 = sadd.s32 %s146, 1
      %p150 = scmp.eq.s32.totalorder %s23, 1
      %p151 = scmp.ne.s32.totalorder %s146, %s148
      %p152 = scmp.eq.s32.totalorder %s23, 0
      %p153 = por %p151, %p152
      %p154 = scmp.ne.s32.totalorder %s146, %s148
      %p155 = scmp.eq.s32.totalorder %s28, 1
      %p156 = por %p154, %p155
      %p157 = scmp.ne.s32.totalorder %s148, %s149
      %p158 = scmp.eq.s32.totalorder %s28, 0
      %p159 = por %p157, %p158
      %p160 = scmp.ne.s32.totalorder %s148, %s149
      %p161 = scmp.eq.s32.totalorder %s29, 1
      %p162 = por %p160, %p161
      %p164 = scmp.ne.s32.totalorder %s149, %s163
      %p165 = scmp.eq.s32.totalorder %s29, 0
      %p166 = por %p164, %p165
      %s168 = sadd.s32 %s167, 1
      %p171 = scmp.eq.s32.totalorder %s23, 1
      %p172 = scmp.ne.s32.totalorder %s167, %s169
      %p173 = scmp.eq.s32.totalorder %s23, 0
      %p174 = por %p172, %p173
      %p175 = scmp.ne.s32.totalorder %s167, %s169
      %p176 = scmp.eq.s32.totalorder %s28, 1
      %p177 = por %p175, %p176
      %p178 = scmp.ne.s32.totalorder %s169, %s170
      %p179 = scmp.eq.s32.totalorder %s28, 0
      %p180 = por %p178, %p179
      %p181 = scmp.ne.s32.totalorder %s169, %s170
      %p182 = scmp.eq.s32.totalorder %s29, 1
      %p183 = por %p181, %p182
      %p185 = scmp.ne.s32.totalorder %s170, %s184
      %p186 = scmp.eq.s32.totalorder %s29, 0
      %p187 = por %p185, %p186
      %s189 = sadd.s32 %s188, 1
      %p192 = scmp.eq.s32.totalorder %s23, 1
      %p193 = scmp.ne.s32.totalorder %s188, %s190
      %p194 = scmp.eq.s32.totalorder %s23, 0
      %p195 = por %p193, %p194
      %p196 = scmp.ne.s32.totalorder %s188, %s190
      %p197 = scmp.eq.s32.totalorder %s28, 1
      %p198 = por %p196, %p197
      %p199 = scmp.ne.s32.totalorder %s190, %s191
      %p200 = scmp.eq.s32.totalorder %s28, 0
      %p201 = por %p199, %p200
      %p202 = scmp.ne.s32.totalorder %s190, %s191
      %p203 = scmp.eq.s32.totalorder %s29, 1
      %p204 = por %p202, %p203
      %p206 = scmp.ne.s32.totalorder %s191, %s205
      %p207 = scmp.eq.s32.totalorder %s29, 0
      %p208 = por %p206, %p207
      %s210 = sadd.s32 %s209, 1
      %p213 = scmp.eq.s32.totalorder %s23, 1
      %p214 = scmp.ne.s32.totalorder %s209, %s211
      %p215 = scmp.eq.s32.totalorder %s23, 0
      %p216 = por %p214, %p215
      %p217 = scmp.ne.s32.totalorder %s209, %s211
      %p218 = scmp.eq.s32.totalorder %s28, 1
      %p219 = por %p217, %p218
      %p220 = scmp.ne.s32.totalorder %s211, %s212
      %p221 = scmp.eq.s32.totalorder %s28, 0
      %p222 = por %p220, %p221
      %p223 = scmp.ne.s32.totalorder %s211, %s212
      %p224 = scmp.eq.s32.totalorder %s29, 1
      %p225 = por %p223, %p224
      %p227 = scmp.ne.s32.totalorder %s212, %s226
      %p228 = scmp.eq.s32.totalorder %s29, 0
      %p229 = por %p227, %p228
      %s231 = sadd.s32 %s230, 1
      %p234 = scmp.eq.s32.totalorder %s23, 1
      %p235 = scmp.ne.s32.totalorder %s230, %s232
      %p236 = scmp.eq.s32.totalorder %s23, 0
      %p237 = por %p235, %p236
      %p238 = scmp.ne.s32.totalorder %s230, %s232
      %p239 = scmp.eq.s32.totalorder %s28, 1
      %p240 = por %p238, %p239
      %p241 = scmp.ne.s32.totalorder %s232, %s233
      %p242 = scmp.eq.s32.totalorder %s28, 0
      %p243 = por %p241, %p242
      %p244 = scmp.ne.s32.totalorder %s232, %s233
      %p245 = scmp.eq.s32.totalorder %s29, 1
      %p246 = por %p244, %p245
      %p248 = scmp.ne.s32.totalorder %s233, %s247
      %p249 = scmp.eq.s32.totalorder %s29, 0
      %p250 = por %p248, %p249
      %s252 = sadd.s32 %s251, 1
      %p255 = scmp.eq.s32.totalorder %s23, 1
      %p256 = scmp.ne.s32.totalorder %s251, %s253
      %p257 = scmp.eq.s32.totalorder %s23, 0
      %p258 = por %p256, %p257
      %p259 = scmp.ne.s32.totalorder %s251, %s253
      %p260 = scmp.eq.s32.totalorder %s28, 1
      %p261 = por %p259, %p260
      %p262 = scmp.ne.s32.totalorder %s253, %s254
      %p263 = scmp.eq.s32.totalorder %s28, 0
      %p264 = por %p262, %p263
      %p265 = scmp.ne.s32.totalorder %s253, %s254
      %p266 = scmp.eq.s32.totalorder %s29, 1
      %p267 = por %p265, %p266
      %p269 = scmp.ne.s32.totalorder %s254, %s268
      %p270 = scmp.eq.s32.totalorder %s29, 0
      %p271 = por %p269, %p270
      %s273 = sadd.s32 %s272, 1
      %p276 = scmp.eq.s32.totalorder %s23, 1
      %p277 = scmp.ne.s32.totalorder %s272, %s274
      %p278 = scmp.eq.s32.totalorder %s23, 0
      %p279 = por %p277, %p278
      %p280 = scmp.ne.s32.totalorder %s272, %s274
      %p281 = scmp.eq.s32.totalorder %s28, 1
      %p282 = por %p280, %p281
      %p283 = scmp.ne.s32.totalorder %s274, %s275
      %p284 = scmp.eq.s32.totalorder %s28, 0
      %p285 = por %p283, %p284
      %p286 = scmp.ne.s32.totalorder %s274, %s275
      %p287 = scmp.eq.s32.totalorder %s29, 1
      %p288 = por %p286, %p287
      %p290 = scmp.ne.s32.totalorder %s275, %s289
      %p291 = scmp.eq.s32.totalorder %s29, 0
      %p292 = por %p290, %p291
      %s294 = sadd.s32 %s293, 1
      %p297 = scmp.eq.s32.totalorder %s23, 1
      %p298 = scmp.ne.s32.totalorder %s293, %s295
      %p299 = scmp.eq.s32.totalorder %s23, 0
      %p300 = por %p298, %p299
      %p301 = scmp.ne.s32.totalorder %s293, %s295
      %p302 = scmp.eq.s32.totalorder %s28, 1
      %p303 = por %p301, %p302
      %p304 = scmp.ne.s32.totalorder %s295, %s296
      %p305 = scmp.eq.s32.totalorder %s28, 0
      %p306 = por %p304, %p305
      %p307 = scmp.ne.s32.totalorder %s295, %s296
      %p308 = scmp.eq.s32.totalorder %s29, 1
      %p309 = por %p307, %p308
      %p311 = scmp.ne.s32.totalorder %s296, %s310
      %p312 = scmp.eq.s32.totalorder %s29, 0
      %p313 = por %p311, %p312
      %s315 = sadd.s32 %s314, 1
      %p318 = scmp.eq.s32.totalorder %s23, 1
      %p319 = scmp.ne.s32.totalorder %s314, %s316
      %p320 = scmp.eq.s32.totalorder %s23, 0
      %p321 = por %p319, %p320
      %p322 = scmp.ne.s32.totalorder %s314, %s316
      %p323 = scmp.eq.s32.totalorder %s28, 1
      %p324 = por %p322, %p323
      %p325 = scmp.ne.s32.totalorder %s316, %s317
      %p326 = scmp.eq.s32.totalorder %s28, 0
      %p327 = por %p325, %p326
      %p328 = scmp.ne.s32.totalorder %s316, %s317
      %p329 = scmp.eq.s32.totalorder %s29, 1
      %p330 = por %p328, %p329
      %p332 = scmp.ne.s32.totalorder %s317, %s331
      %p333 = scmp.eq.s32.totalorder %s29, 0
      %p334 = por %p332, %p333
      %s335 = ssub.s32 %s23, %s30
      %p336 = scmp.eq.s32.totalorder %s335, 0
      %s338 = sadd.s32 %s337, 1
      %s339 = scalar_select %p336, %s337, %s338
      %p342 = pneg %p336
      %p343 = scmp.eq.s32.totalorder %s23, 1
      %p344 = por %p342, %p343
      %p345 = scmp.ne.s32.totalorder %s337, %s340
      %p346 = scmp.eq.s32.totalorder %s23, 0
      %p347 = por %p345, %p346
      %p348 = scmp.ne.s32.totalorder %s337, %s340
      %p349 = scmp.eq.s32.totalorder %s28, 1
      %p350 = por %p348, %p349
      %p351 = scmp.ne.s32.totalorder %s340, %s341
      %p352 = scmp.eq.s32.totalorder %s28, 0
      %p353 = por %p351, %p352
      %p354 = scmp.ne.s32.totalorder %s340, %s341
      %p355 = scmp.eq.s32.totalorder %s29, 1
      %p356 = por %p354, %p355
      %p358 = scmp.ne.s32.totalorder %s341, %s357
      %p359 = scmp.eq.s32.totalorder %s29, 0
      %p360 = por %p358, %p359
      %p361 = scmp.le.s32.totalorder 1, %s23
      %p362 = scmp.lt.s32.totalorder %s23, 3
      %p363 = pnand %p361, %p362
      %p364 = pneg %p363
      // Predicated region
      $region9: #{transformer_layer.1} parent=5 // pred_check
        _
      $region10: #{transformer_layer.1} parent=5 // pred_check_branch
        %366 = sbr.rel (%p363) target = $region12
      $region11: #{transformer_layer.1} parent=5 // pred_region
        %s367 = ssub.s32 %s23, 1
        // Predicated region
        $region13: #{transformer_layer.1} parent=11 // pred_check
          %p368 = pneg %p96
        $region14: #{transformer_layer.1} parent=11 // pred_check_branch
          %370 = sbr.rel (%p368) target = $region16
        $region15: #{transformer_layer.1} parent=11 // pred_region
          _
        $region16: #{transformer_layer.1} parent=11 // pred_fallthru
          _
        // Predicated region
        $region17: #{transformer_layer.1} parent=11 // pred_check
          %p371 = pneg %p117
        $region18: #{transformer_layer.1} parent=11 // pred_check_branch
          %373 = sbr.rel (%p371) target = $region20
        $region19: #{transformer_layer.1} parent=11 // pred_region
          _
        $region20: #{transformer_layer.1} parent=11 // pred_fallthru
          _
        // Predicated region
        $region21: #{transformer_layer.1} parent=11 // pred_check
          %p374 = pneg %p138
        $region22: #{transformer_layer.1} parent=11 // pred_check_branch
          %376 = sbr.rel (%p374) target = $region24
        $region23: #{transformer_layer.1} parent=11 // pred_region
          _
        $region24: #{transformer_layer.1} parent=11 // pred_fallthru
          _
        // Predicated region
        $region25: #{transformer_layer.1} parent=11 // pred_check
          %p377 = pneg %p159
        $region26: #{transformer_layer.1} parent=11 // pred_check_branch
          %379 = sbr.rel (%p377) target = $region28
        $region27: #{transformer_layer.1} parent=11 // pred_region
          _
        $region28: #{transformer_layer.1} parent=11 // pred_fallthru
          _
        // Predicated region
        $region29: #{transformer_layer.1} parent=11 // pred_check
          %p380 = pneg %p180
        $region30: #{transformer_layer.1} parent=11 // pred_check_branch
          %382 = sbr.rel (%p380) target = $region32
        $region31: #{transformer_layer.1} parent=11 // pred_region
          _
        $region32: #{transformer_layer.1} parent=11 // pred_fallthru
          _
        // Predicated region
        $region33: #{transformer_layer.1} parent=11 // pred_check
          %p383 = pneg %p201
        $region34: #{transformer_layer.1} parent=11 // pred_check_branch
          %385 = sbr.rel (%p383) target = $region36
        $region35: #{transformer_layer.1} parent=11 // pred_region
          _
        $region36: #{transformer_layer.1} parent=11 // pred_fallthru
          _
        // Predicated region
        $region37: #{transformer_layer.1} parent=11 // pred_check
          %p386 = pneg %p222
        $region38: #{transformer_layer.1} parent=11 // pred_check_branch
          %388 = sbr.rel (%p386) target = $region40
        $region39: #{transformer_layer.1} parent=11 // pred_region
          _
        $region40: #{transformer_layer.1} parent=11 // pred_fallthru
          _
        // Predicated region
        $region41: #{transformer_layer.1} parent=11 // pred_check
          %p389 = pneg %p243
        $region42: #{transformer_layer.1} parent=11 // pred_check_branch
          %391 = sbr.rel (%p389) target = $region44
        $region43: #{transformer_layer.1} parent=11 // pred_region
          _
        $region44: #{transformer_layer.1} parent=11 // pred_fallthru
          _
        // Predicated region
        $region45: #{transformer_layer.1} parent=11 // pred_check
          %p392 = pneg %p264
        $region46: #{transformer_layer.1} parent=11 // pred_check_branch
          %394 = sbr.rel (%p392) target = $region48
        $region47: #{transformer_layer.1} parent=11 // pred_region
          _
        $region48: #{transformer_layer.1} parent=11 // pred_fallthru
          _
        // Predicated region
        $region49: #{transformer_layer.1} parent=11 // pred_check
          %p395 = pneg %p285
        $region50: #{transformer_layer.1} parent=11 // pred_check_branch
          %397 = sbr.rel (%p395) target = $region52
        $region51: #{transformer_layer.1} parent=11 // pred_region
          _
        $region52: #{transformer_layer.1} parent=11 // pred_fallthru
          _
        // Predicated region
        $region53: #{transformer_layer.1} parent=11 // pred_check
          %p398 = pneg %p306
        $region54: #{transformer_layer.1} parent=11 // pred_check_branch
          %400 = sbr.rel (%p398) target = $region56
        $region55: #{transformer_layer.1} parent=11 // pred_region
          _
        $region56: #{transformer_layer.1} parent=11 // pred_fallthru
          _
        // Predicated region
        $region57: #{transformer_layer.1} parent=11 // pred_check
          %p401 = pneg %p327
        $region58: #{transformer_layer.1} parent=11 // pred_check_branch
          %403 = sbr.rel (%p401) target = $region60
        $region59: #{transformer_layer.1} parent=11 // pred_region
          _
        $region60: #{transformer_layer.1} parent=11 // pred_fallthru
          _
      $region12: #{transformer_layer.1} parent=5 // pred_fallthru
        _
      %p404 = scmp.lt.s32.totalorder %s23, 2
      // Predicated region
      $region61: #{transformer_layer.1} parent=5 // pred_check
        %p405 = pneg %p404
      $region62: #{transformer_layer.1} parent=5 // pred_check_branch
        %407 = sbr.rel (%p405) target = $region64
      $region63: #{transformer_layer.1} parent=5 // pred_region
        // Predicated region
        $region65: #{transformer_layer.1} parent=63 // pred_check
          %p408 = pneg %p43
        $region66: #{transformer_layer.1} parent=63 // pred_check_branch
          %410 = sbr.rel (%p408) target = $region68
        $region67: #{transformer_layer.1} parent=63 // pred_region
          %p411 = scmp.lt.s32.totalorder %s23, 1
          %s412 = scalar_select %p411, %s23, 1
          %s413 = smul.addr %s412, 8
          %s414 = scalar_lea.vmem %s0, %s413
        $region68: #{transformer_layer.1} parent=63 // pred_fallthru
          _
        // Predicated region
        $region69: #{transformer_layer.1} parent=63 // pred_check
          %p415 = pneg %p69
        $region70: #{transformer_layer.1} parent=63 // pred_check_branch
          %417 = sbr.rel (%p415) target = $region72
        $region71: #{transformer_layer.1} parent=63 // pred_region
          %p418 = scmp.lt.s32.totalorder %s23, 1
          %s419 = scalar_select %p418, %s23, 1
          %s420 = smul.addr %s419, 4
          %s421 = smul.addr %s420, 8
          %s422 = scalar_lea.vmem %s1, %s421
        $region72: #{transformer_layer.1} parent=63 // pred_fallthru
          _
      $region64: #{transformer_layer.1} parent=5 // pred_fallthru
        _
      %p423 = scmp.le.s32.totalorder 1, %s23
      %p424 = scmp.lt.s32.totalorder %s23, 3
      %p425 = pnand %p423, %p424
      %p426 = pneg %p425
      // Predicated region
      $region73: #{transformer_layer.1} parent=5 // pred_check
        _
      $region74: #{transformer_layer.1} parent=5 // pred_check_branch
        %428 = sbr.rel (%p425) target = $region76
      $region75: #{transformer_layer.1} parent=5 // pred_region
        %s429 = ssub.s32 %s23, 1
        %p430 = scmp.lt.s32.totalorder %s28, 1
        %s431 = scalar_select %p430, %s28, 1
        %s432 = smul.addr %s431, 8
        %s433 = scalar_lea.vmem %s0, %s432
        %p434 = pneg %p49
        %p435 = pneg %p46
        %p436 = scmp.lt.s32.totalorder %s28, 1
        %s437 = scalar_select %p436, %s28, 1
        %s438 = smul.addr %s437, 4
        %s439 = smul.addr %s438, 8
        %s440 = scalar_lea.vmem %s1, %s439
        %p441 = pneg %p75
        %p442 = pneg %p72
        %p443 = pneg %p96
        %p444 = pneg %p93
        %p445 = pneg %p117
        %p446 = pneg %p114
        %p447 = pneg %p138
        %p448 = pneg %p135
        %p449 = pneg %p159
        %p450 = pneg %p156
        %p451 = pneg %p180
        %p452 = pneg %p177
        %p453 = pneg %p201
        %p454 = pneg %p198
        %p455 = pneg %p222
        %p456 = pneg %p219
        %p457 = pneg %p243
        %p458 = pneg %p240
        %p459 = pneg %p264
        %p460 = pneg %p261
        %p461 = pneg %p285
        %p462 = pneg %p282
        %p463 = pneg %p306
        %p464 = pneg %p303
        %p465 = pneg %p327
        %p466 = pneg %p324
        %p467 = pneg %p353
        %p468 = pneg %p350
        %s469 = sand.u32 %s340, 1
        %s470 = scalar_lea.sflag [#allocation4], %s469
        %s471 = sand.u32 %s340, 1
        %s472 = smul.addr %s471, 8
        %s473 = scalar_lea.vmem [#allocation3], %s472
        %p474 = scmp.lt.s32.totalorder %s28, 1
        %s475 = scalar_select %p474, %s28, 1
        %s476 = smul.addr %s475, 8
        %s477 = scalar_lea.vmem %s0, %s476
        %p478 = scmp.lt.s32.totalorder %s28, 1
        %s479 = scalar_select %p478, %s28, 1
        %s480 = smul.addr %s479, 4
        %s481 = smul.addr %s480, 8
        %s482 = scalar_lea.vmem %s1, %s481
        %v484 = vld [vmem:[%s477] sm:$0xff]
        %v485 = vld [vmem:[%s6] sm:$0x1]
        %v486 = vld [vmem:[%s7] sm:$0x1]
        %vm487 = vcmask 261120
        %v488 = vsel %vm487, %v484, 0.0
        %489 = vadd.xlane.f32.xlu0 %v488
        %v490 = vpop.xlane.xlu0 %489
        %v491 = vrcp.pop 32.0
        %v492 = vmul.f32 %v490, %v491
        %v493 = vsub.f32 %v484, %v492
        %v494 = vmul.f32 %v493, %v493
        %v495 = vsel %vm487, %v494, 0.0
        %496 = vadd.xlane.f32.xlu0 %v495
        %v497 = vpop.xlane.xlu0 %496
        %v498 = vmul.f32 %v497, %v491
        %v499 = vadd.f32 %v498, 1e-06
        %v500 = vrsqrt.pop %v499
        %v501 = vmul.f32 %v493, %v500
        %v503 = vlaneseq
        %v504 = vshrl.u32 %v503, 7
        %v505 = vsub.s32 0, %v504
        %v506 = vrot.slane %v485, %v505
        %v508 = vmul.f32 %v501, %v506
        %v510 = vlaneseq
        %v511 = vshrl.u32 %v510, 7
        %v512 = vsub.s32 0, %v511
        %v513 = vrot.slane %v486, %v512
        %v515 = vadd.f32 %v508, %v513
        %v516 = vpack.c.bf16 %v515, %v515
        %v517 = vld [vmem:[%s2] sm:$0xf]
        %v518 = vld [vmem:[%s2 + $0x4] sm:$0xf]
        %v519 = vld [vmem:[%s2 + $0x8] sm:$0xf]
        %v520 = vld [vmem:[%s2 + $0xc] sm:$0xf]
        %v521 = vld [vmem:[%s3] sm:$0x1]
        %v523 = vlaneseq
        %v524 = vshrl.u32 %v523, 7
        %v525 = vsub.s32 0, %v524
        %v526 = vrot.slane %v521, %v525
        %v532 = vunpack.c.l.b16 %v517
        %v533 = vunpack.c.l.b16 %v518
        %v534 = vunpack.c.l.b16 %v519
        %v535 = vunpack.c.l.b16 %v520
        %v536 = vpack.c.b16 %v533, %v532
        %v537 = vpack.c.b16 %v535, %v534
        %v541 = vsel %vm487, %v516, 0
        %543 = vmatprep.subr.bf16.mxu0 0
        %544 = vmatpush1.bf16.msra.mxu0 %v536
        %545 = vmatprep.subr.bf16.mxu0 0
        %546 = vmatpush1.bf16.msra.mxu0 %v537
        %547 = vmatprep.subr.bf16.mxu0 0
        %548 = vmatpush1.bf16.msra.mxu0 0
        %549 = vmatprep.subr.bf16.mxu0 0
        %550 = vmatpush1.bf16.msra.mxu0 0
        %551 = vmatprep.subr.bf16.mxu0 0
        %552 = vmatpush1.bf16.msra.mxu0 0
        %553 = vmatprep.subr.bf16.mxu0 0
        %554 = vmatpush1.bf16.msra.mxu0 0
        %555 = vmatprep.subr.bf16.mxu0 0
        %556 = vmatpush1.bf16.msra.mxu0 0
        %557 = vmatprep.subr.bf16.mxu0 0
        %558 = vmatpush1.bf16.msra.mxu0 0
        %559 = vmatprep.subr.bf16.mxu0 0
        %560 = vmatpush1.bf16.msra.mxu0 0
        %561 = vmatprep.subr.bf16.mxu0 0
        %562 = vmatpush1.bf16.msra.mxu0 0
        %563 = vmatprep.subr.bf16.mxu0 0
        %564 = vmatpush1.bf16.msra.mxu0 0
        %565 = vmatprep.subr.bf16.mxu0 0
        %566 = vmatpush1.bf16.msra.mxu0 0
        %567 = vmatprep.subr.bf16.mxu0 0
        %568 = vmatpush1.bf16.msra.mxu0 0
        %569 = vmatprep.subr.bf16.mxu0 0
        %570 = vmatpush1.bf16.msra.mxu0 0
        %571 = vmatprep.subr.bf16.mxu0 0
        %572 = vmatpush1.bf16.msra.mxu0 0
        %573 = vmatprep.subr.bf16.mxu0 0
        %574 = vmatpush1.bf16.msra.mxu0 0
        %575 = vmatprep.mubr.bf16.mxu0 0
        %576 = vmatmul.mubr.bf16.gmra.mrb[0].mxu0 %v541
        %v577 = vpop.f32.mrb[0].mxu0
        %v578 = vadd.f32 %v526, %v577
        %v579 = vpop.f32.mrb[0].mxu0
        %v580 = vpop.f32.mrb[0].mxu0
        %v581 = vpop.f32.mrb[0].mxu0
        %582 = vdwg.mxu0
        %v583 = vmul.f32 %v578, 0.35355338
        %v584 = vpack.c.bf16 %v583, %v583
        %586 = vrot.lane.b32.xlu0 %v578, 96
        %v587 = vpop.permute.xlu0 %586
        %589 = vxpose.xlu0.b32.start [1/16] %v587, 128
        %590 = vxpose.xlu0.b32.cont [2/16] 0.0, 128
        %591 = vxpose.xlu0.b32.cont [3/16] 0.0, 128
        %592 = vxpose.xlu0.b32.cont [4/16] 0.0, 128
        %593 = vxpose.xlu0.b32.cont [5/16] 0.0, 128
        %594 = vxpose.xlu0.b32.cont [6/16] 0.0, 128
        %595 = vxpose.xlu0.b32.cont [7/16] 0.0, 128
        %596 = vxpose.xlu0.b32.cont [8/16] 0.0, 128
        %597 = vxpose.xlu0.b32.cont [9/16] 0.0, 128
        %598 = vxpose.xlu0.b32.cont [10/16] 0.0, 128
        %599 = vxpose.xlu0.b32.cont [11/16] 0.0, 128
        %600 = vxpose.xlu0.b32.cont [12/16] 0.0, 128
        %601 = vxpose.xlu0.b32.cont [13/16] 0.0, 128
        %602 = vxpose.xlu0.b32.cont [14/16] 0.0, 128
        %603 = vxpose.xlu0.b32.cont [15/16] 0.0, 128
        %604 = vxpose.xlu0.b32.end [16/16] 0.0, 128
        %v605 = vpop.trf.xlu0
        %v606 = vpop.trf.xlu0
        %v607 = vpop.trf.xlu0
        %v608 = vpop.trf.xlu0
        %v609 = vpop.trf.xlu0
        %v610 = vpop.trf.xlu0
        %v611 = vpop.trf.xlu0
        %v612 = vpop.trf.xlu0
        %v613 = vpop.trf.xlu0
        %v614 = vpop.trf.xlu0
        %v615 = vpop.trf.xlu0
        %v616 = vpop.trf.xlu0
        %v617 = vpop.trf.xlu0
        %v618 = vpop.trf.xlu0
        %v619 = vpop.trf.xlu0
        %v620 = vpop.trf.xlu0
        %v621 = vpack.c.bf16 %v605, %v605
        %v622 = vld [vmem:[%s482] sm:$0xff]
        %vm623 = vcmask 64512
        %v625 = vsel %vm623, %v584, 0
        %vm627 = vcmask 1043456
        %v629 = vsel %vm627, %v621, 0
        %631 = vmatprep.subr.bf16.mxu0 0
        %632 = vmatpush1.bf16.msra.mxu0 %v629
        %633 = vmatprep.subr.bf16.mxu0 0
        %634 = vmatpush1.bf16.msra.mxu0 0
        %635 = vmatprep.subr.bf16.mxu0 0
        %636 = vmatpush1.bf16.msra.mxu0 0
        %637 = vmatprep.subr.bf16.mxu0 0
        %638 = vmatpush1.bf16.msra.mxu0 0
        %639 = vmatprep.subr.bf16.mxu0 0
        %640 = vmatpush1.bf16.msra.mxu0 0
        %641 = vmatprep.subr.bf16.mxu0 0
        %642 = vmatpush1.bf16.msra.mxu0 0
        %643 = vmatprep.subr.bf16.mxu0 0
        %644 = vmatpush1.bf16.msra.mxu0 0
        %645 = vmatprep.subr.bf16.mxu0 0
        %646 = vmatpush1.bf16.msra.mxu0 0
        %647 = vmatprep.subr.bf16.mxu0 0
        %648 = vmatpush1.bf16.msra.mxu0 0
        %649 = vmatprep.subr.bf16.mxu0 0
        %650 = vmatpush1.bf16.msra.mxu0 0
        %651 = vmatprep.subr.bf16.mxu0 0
        %652 = vmatpush1.bf16.msra.mxu0 0
        %653 = vmatprep.subr.bf16.mxu0 0
        %654 = vmatpush1.bf16.msra.mxu0 0
        %655 = vmatprep.subr.bf16.mxu0 0
        %656 = vmatpush1.bf16.msra.mxu0 0
        %657 = vmatprep.subr.bf16.mxu0 0
        %658 = vmatpush1.bf16.msra.mxu0 0
        %659 = vmatprep.subr.bf16.mxu0 0
        %660 = vmatpush1.bf16.msra.mxu0 0
        %661 = vmatprep.subr.bf16.mxu0 0
        %662 = vmatpush1.bf16.msra.mxu0 0
        %663 = vmatprep.mubr.bf16.mxu0 0
        %664 = vmatmul.mubr.bf16.gmra.mrb[0].mxu0 %v625
        %v665 = vpop.f32.mrb[0].mxu0
        %v666 = vadd.f32 %v622, %v665
        %v667 = vpop.f32.mrb[0].mxu0
        %v668 = vpop.f32.mrb[0].mxu0
        %v669 = vpop.f32.mrb[0].mxu0
        %670 = vdwg.mxu0
        %v671 = vsel %vm623, %v666, -inf
        %672 = vmax.xlane.f32.xlu0 %v671
        %v673 = vpop.xlane.xlu0 %672
        %v674 = vsub.f32 %v666, %v673
        %v675 = vmul.f32 %v674, 1.442695
        %v676 = vpow.pop %v675
        %v677 = vsel %vm623, %v676, 0.0
        %678 = vadd.xlane.f32.xlu0 %v677
        %v679 = vpop.xlane.xlu0 %678
        %v680 = vrcp.pop %v679
        %v681 = vmul.f32 %v676, %v680
        %v682 = vpack.c.bf16 %v681, %v681
        %v683 = vpack.c.bf16 %v578, %v578
        %685 = vrot.lane.b32.xlu0 %v683, 64
        %v686 = vpop.permute.xlu0 %685
        %v688 = vsel %vm623, %v682, 0
        %v691 = vsel %vm627, %v686, 0
        %693 = vmatprep.subr.bf16.mxu0 0
        %694 = vmatpush1.bf16.msra.mxu0 %v691
        %695 = vmatprep.subr.bf16.mxu0 0
        %696 = vmatpush1.bf16.msra.mxu0 0
        %697 = vmatprep.subr.bf16.mxu0 0
        %698 = vmatpush1.bf16.msra.mxu0 0
        %699 = vmatprep.subr.bf16.mxu0 0
        %700 = vmatpush1.bf16.msra.mxu0 0
        %701 = vmatprep.subr.bf16.mxu0 0
        %702 = vmatpush1.bf16.msra.mxu0 0
        %703 = vmatprep.subr.bf16.mxu0 0
        %704 = vmatpush1.bf16.msra.mxu0 0
        %705 = vmatprep.subr.bf16.mxu0 0
        %706 = vmatpush1.bf16.msra.mxu0 0
        %707 = vmatprep.subr.bf16.mxu0 0
        %708 = vmatpush1.bf16.msra.mxu0 0
        %709 = vmatprep.subr.bf16.mxu0 0
        %710 = vmatpush1.bf16.msra.mxu0 0
        %711 = vmatprep.subr.bf16.mxu0 0
        %712 = vmatpush1.bf16.msra.mxu0 0
        %713 = vmatprep.subr.bf16.mxu0 0
        %714 = vmatpush1.bf16.msra.mxu0 0
        %715 = vmatprep.subr.bf16.mxu0 0
        %716 = vmatpush1.bf16.msra.mxu0 0
        %717 = vmatprep.subr.bf16.mxu0 0
        %718 = vmatpush1.bf16.msra.mxu0 0
        %719 = vmatprep.subr.bf16.mxu0 0
        %720 = vmatpush1.bf16.msra.mxu0 0
        %721 = vmatprep.subr.bf16.mxu0 0
        %722 = vmatpush1.bf16.msra.mxu0 0
        %723 = vmatprep.subr.bf16.mxu0 0
        %724 = vmatpush1.bf16.msra.mxu0 0
        %725 = vmatprep.mubr.bf16.mxu0 0
        %726 = vmatmul.mubr.bf16.gmra.mrb[0].mxu0 %v688
        %v727 = vpop.f32.mrb[0].mxu0
        %v728 = vadd.f32 0.0, %v727
        %v729 = vpop.f32.mrb[0].mxu0
        %v730 = vpop.f32.mrb[0].mxu0
        %v731 = vpop.f32.mrb[0].mxu0
        %732 = vdwg.mxu0
        %733 = vst.msk [vmem:[#allocation2] sm:$0xff] %vm623, %v728
        %734 = vrot.lane.b32.xlu0 %v578, 88
        %v735 = vpop.permute.xlu0 %734
        %737 = vxpose.xlu0.b32.start [1/16] %v735, 128
        %738 = vxpose.xlu0.b32.cont [2/16] 0.0, 128
        %739 = vxpose.xlu0.b32.cont [3/16] 0.0, 128
        %740 = vxpose.xlu0.b32.cont [4/16] 0.0, 128
        %741 = vxpose.xlu0.b32.cont [5/16] 0.0, 128
        %742 = vxpose.xlu0.b32.cont [6/16] 0.0, 128
        %743 = vxpose.xlu0.b32.cont [7/16] 0.0, 128
        %744 = vxpose.xlu0.b32.cont [8/16] 0.0, 128
        %745 = vxpose.xlu0.b32.cont [9/16] 0.0, 128
        %746 = vxpose.xlu0.b32.cont [10/16] 0.0, 128
        %747 = vxpose.xlu0.b32.cont [11/16] 0.0, 128
        %748 = vxpose.xlu0.b32.cont [12/16] 0.0, 128
        %749 = vxpose.xlu0.b32.cont [13/16] 0.0, 128
        %750 = vxpose.xlu0.b32.cont [14/16] 0.0, 128
        %751 = vxpose.xlu0.b32.cont [15/16] 0.0, 128
        %752 = vxpose.xlu0.b32.end [16/16] 0.0, 128
        %v753 = vpop.trf.xlu0
        %v754 = vpop.trf.xlu0
        %v755 = vpop.trf.xlu0
        %v756 = vpop.trf.xlu0
        %v757 = vpop.trf.xlu0
        %v758 = vpop.trf.xlu0
        %v759 = vpop.trf.xlu0
        %v760 = vpop.trf.xlu0
        %v761 = vpop.trf.xlu0
        %v762 = vpop.trf.xlu0
        %v763 = vpop.trf.xlu0
        %v764 = vpop.trf.xlu0
        %v765 = vpop.trf.xlu0
        %v766 = vpop.trf.xlu0
        %v767 = vpop.trf.xlu0
        %v768 = vpop.trf.xlu0
        %v769 = vpack.c.bf16 %v753, %v753
        %s770 = scalar_lea.vmem %s482, 8
        %v771 = vld [vmem:[%s770] sm:$0xff]
        %773 = vrot.lane.b32.xlu0 %v584, 120
        %v774 = vpop.permute.xlu0 %773
        %v776 = vsel %vm623, %v774, 0
        %v779 = vsel %vm627, %v769, 0
        %781 = vmatprep.subr.bf16.mxu0 0
        %782 = vmatpush1.bf16.msra.mxu0 %v779
        %783 = vmatprep.subr.bf16.mxu0 0
        %784 = vmatpush1.bf16.msra.mxu0 0
        %785 = vmatprep.subr.bf16.mxu0 0
        %786 = vmatpush1.bf16.msra.mxu0 0
        %787 = vmatprep.subr.bf16.mxu0 0
        %788 = vmatpush1.bf16.msra.mxu0 0
        %789 = vmatprep.subr.bf16.mxu0 0
        %790 = vmatpush1.bf16.msra.mxu0 0
        %791 = vmatprep.subr.bf16.mxu0 0
        %792 = vmatpush1.bf16.msra.mxu0 0
        %793 = vmatprep.subr.bf16.mxu0 0
        %794 = vmatpush1.bf16.msra.mxu0 0
        %795 = vmatprep.subr.bf16.mxu0 0
        %796 = vmatpush1.bf16.msra.mxu0 0
        %797 = vmatprep.subr.bf16.mxu0 0
        %798 = vmatpush1.bf16.msra.mxu0 0
        %799 = vmatprep.subr.bf16.mxu0 0
        %800 = vmatpush1.bf16.msra.mxu0 0
        %801 = vmatprep.subr.bf16.mxu0 0
        %802 = vmatpush1.bf16.msra.mxu0 0
        %803 = vmatprep.subr.bf16.mxu0 0
        %804 = vmatpush1.bf16.msra.mxu0 0
        %805 = vmatprep.subr.bf16.mxu0 0
        %806 = vmatpush1.bf16.msra.mxu0 0
        %807 = vmatprep.subr.bf16.mxu0 0
        %808 = vmatpush1.bf16.msra.mxu0 0
        %809 = vmatprep.subr.bf16.mxu0 0
        %810 = vmatpush1.bf16.msra.mxu0 0
        %811 = vmatprep.subr.bf16.mxu0 0
        %812 = vmatpush1.bf16.msra.mxu0 0
        %813 = vmatprep.mubr.bf16.mxu0 0
        %814 = vmatmul.mubr.bf16.gmra.mrb[0].mxu0 %v776
        %v815 = vpop.f32.mrb[0].mxu0
        %v816 = vadd.f32 %v771, %v815
        %v817 = vpop.f32.mrb[0].mxu0
        %v818 = vpop.f32.mrb[0].mxu0
        %v819 = vpop.f32.mrb[0].mxu0
        %820 = vdwg.mxu0
        %v821 = vsel %vm623, %v816, -inf
        %822 = vmax.xlane.f32.xlu0 %v821
        %v823 = vpop.xlane.xlu0 %822
        %v824 = vsub.f32 %v816, %v823
        %v825 = vmul.f32 %v824, 1.442695
        %v826 = vpow.pop %v825
        %v827 = vsel %vm623, %v826, 0.0
        %828 = vadd.xlane.f32.xlu0 %v827
        %v829 = vpop.xlane.xlu0 %828
        %v830 = vrcp.pop %v829
        %v831 = vmul.f32 %v826, %v830
        %v832 = vpack.c.bf16 %v831, %v831
        %833 = vrot.lane.b32.xlu0 %v683, 56
        %v834 = vpop.permute.xlu0 %833
        %v836 = vsel %vm623, %v832, 0
        %v839 = vsel %vm627, %v834, 0
        %841 = vmatprep.subr.bf16.mxu0 0
        %842 = vmatpush1.bf16.msra.mxu0 %v839
        %843 = vmatprep.subr.bf16.mxu0 0
        %844 = vmatpush1.bf16.msra.mxu0 0
        %845 = vmatprep.subr.bf16.mxu0 0
        %846 = vmatpush1.bf16.msra.mxu0 0
        %847 = vmatprep.subr.bf16.mxu0 0
        %848 = vmatpush1.bf16.msra.mxu0 0
        %849 = vmatprep.subr.bf16.mxu0 0
        %850 = vmatpush1.bf16.msra.mxu0 0
        %851 = vmatprep.subr.bf16.mxu0 0
        %852 = vmatpush1.bf16.msra.mxu0 0
        %853 = vmatprep.subr.bf16.mxu0 0
        %854 = vmatpush1.bf16.msra.mxu0 0
        %855 = vmatprep.subr.bf16.mxu0 0
        %856 = vmatpush1.bf16.msra.mxu0 0
        %857 = vmatprep.subr.bf16.mxu0 0
        %858 = vmatpush1.bf16.msra.mxu0 0
        %859 = vmatprep.subr.bf16.mxu0 0
        %860 = vmatpush1.bf16.msra.mxu0 0
        %861 = vmatprep.subr.bf16.mxu0 0
        %862 = vmatpush1.bf16.msra.mxu0 0
        %863 = vmatprep.subr.bf16.mxu0 0
        %864 = vmatpush1.bf16.msra.mxu0 0
        %865 = vmatprep.subr.bf16.mxu0 0
        %866 = vmatpush1.bf16.msra.mxu0 0
        %867 = vmatprep.subr.bf16.mxu0 0
        %868 = vmatpush1.bf16.msra.mxu0 0
        %869 = vmatprep.subr.bf16.mxu0 0
        %870 = vmatpush1.bf16.msra.mxu0 0
        %871 = vmatprep.subr.bf16.mxu0 0
        %872 = vmatpush1.bf16.msra.mxu0 0
        %873 = vmatprep.mubr.bf16.mxu0 0
        %874 = vmatmul.mubr.bf16.gmra.mrb[0].mxu0 %v836
        %v875 = vpop.f32.mrb[0].mxu0
        %v876 = vadd.f32 0.0, %v875
        %v877 = vpop.f32.mrb[0].mxu0
        %v878 = vpop.f32.mrb[0].mxu0
        %v879 = vpop.f32.mrb[0].mxu0
        %880 = vdwg.mxu0
        %882 = vrot.lane.b32.xlu0 %v876, 8
        %v883 = vpop.permute.xlu0 %882
        %vm885 = vcmask 130112
        %886 = vst.msk [vmem:[#allocation2] sm:$0xff] %vm885, %v883
        %887 = vrot.lane.b32.xlu0 %v578, 80
        %v888 = vpop.permute.xlu0 %887
        %890 = vxpose.xlu0.b32.start [1/16] %v888, 128
        %891 = vxpose.xlu0.b32.cont [2/16] 0.0, 128
        %892 = vxpose.xlu0.b32.cont [3/16] 0.0, 128
        %893 = vxpose.xlu0.b32.cont [4/16] 0.0, 128
        %894 = vxpose.xlu0.b32.cont [5/16] 0.0, 128
        %895 = vxpose.xlu0.b32.cont [6/16] 0.0, 128
        %896 = vxpose.xlu0.b32.cont [7/16] 0.0, 128
        %897 = vxpose.xlu0.b32.cont [8/16] 0.0, 128
        %898 = vxpose.xlu0.b32.cont [9/16] 0.0, 128
        %899 = vxpose.xlu0.b32.cont [10/16] 0.0, 128
        %900 = vxpose.xlu0.b32.cont [11/16] 0.0, 128
        %901 = vxpose.xlu0.b32.cont [12/16] 0.0, 128
        %902 = vxpose.xlu0.b32.cont [13/16] 0.0, 128
        %903 = vxpose.xlu0.b32.cont [14/16] 0.0, 128
        %904 = vxpose.xlu0.b32.cont [15/16] 0.0, 128
        %905 = vxpose.xlu0.b32.end [16/16] 0.0, 128
        %v906 = vpop.trf.xlu0
        %v907 = vpop.trf.xlu0
        %v908 = vpop.trf.xlu0
        %v909 = vpop.trf.xlu0
        %v910 = vpop.trf.xlu0
        %v911 = vpop.trf.xlu0
        %v912 = vpop.trf.xlu0
        %v913 = vpop.trf.xlu0
        %v914 = vpop.trf.xlu0
        %v915 = vpop.trf.xlu0
        %v916 = vpop.trf.xlu0
        %v917 = vpop.trf.xlu0
        %v918 = vpop.trf.xlu0
        %v919 = vpop.trf.xlu0
        %v920 = vpop.trf.xlu0
        %v921 = vpop.trf.xlu0
        %v922 = vpack.c.bf16 %v906, %v906
        %s923 = scalar_lea.vmem %s482, 16
        %v924 = vld [vmem:[%s923] sm:$0xff]
        %925 = vrot.lane.b32.xlu0 %v584, 112
        %v926 = vpop.permute.xlu0 %925
        %v928 = vsel %vm623, %v926, 0
        %v931 = vsel %vm627, %v922, 0
        %933 = vmatprep.subr.bf16.mxu0 0
        %934 = vmatpush1.bf16.msra.mxu0 %v931
        %935 = vmatprep.subr.bf16.mxu0 0
        %936 = vmatpush1.bf16.msra.mxu0 0
        %937 = vmatprep.subr.bf16.mxu0 0
        %938 = vmatpush1.bf16.msra.mxu0 0
        %939 = vmatprep.subr.bf16.mxu0 0
        %940 = vmatpush1.bf16.msra.mxu0 0
        %941 = vmatprep.subr.bf16.mxu0 0
        %942 = vmatpush1.bf16.msra.mxu0 0
        %943 = vmatprep.subr.bf16.mxu0 0
        %944 = vmatpush1.bf16.msra.mxu0 0
        %945 = vmatprep.subr.bf16.mxu0 0
        %946 = vmatpush1.bf16.msra.mxu0 0
        %947 = vmatprep.subr.bf16.mxu0 0
        %948 = vmatpush1.bf16.msra.mxu0 0
        %949 = vmatprep.subr.bf16.mxu0 0
        %950 = vmatpush1.bf16.msra.mxu0 0
        %951 = vmatprep.subr.bf16.mxu0 0
        %952 = vmatpush1.bf16.msra.mxu0 0
        %953 = vmatprep.subr.bf16.mxu0 0
        %954 = vmatpush1.bf16.msra.mxu0 0
        %955 = vmatprep.subr.bf16.mxu0 0
        %956 = vmatpush1.bf16.msra.mxu0 0
        %957 = vmatprep.subr.bf16.mxu0 0
        %958 = vmatpush1.bf16.msra.mxu0 0
        %959 = vmatprep.subr.bf16.mxu0 0
        %960 = vmatpush1.bf16.msra.mxu0 0
        %961 = vmatprep.subr.bf16.mxu0 0
        %962 = vmatpush1.bf16.msra.mxu0 0
        %963 = vmatprep.subr.bf16.mxu0 0
        %964 = vmatpush1.bf16.msra.mxu0 0
        %965 = vmatprep.mubr.bf16.mxu0 0
        %966 = vmatmul.mubr.bf16.gmra.mrb[0].mxu0 %v928
        %v967 = vpop.f32.mrb[0].mxu0
        %v968 = vadd.f32 %v924, %v967
        %v969 = vpop.f32.mrb[0].mxu0
        %v970 = vpop.f32.mrb[0].mxu0
        %v971 = vpop.f32.mrb[0].mxu0
        %972 = vdwg.mxu0
        %v973 = vsel %vm623, %v968, -inf
        %974 = vmax.xlane.f32.xlu0 %v973
        %v975 = vpop.xlane.xlu0 %974
        %v976 = vsub.f32 %v968, %v975
        %v977 = vmul.f32 %v976, 1.442695
        %v978 = vpow.pop %v977
        %v979 = vsel %vm623, %v978, 0.0
        %980 = vadd.xlane.f32.xlu0 %v979
        %v981 = vpop.xlane.xlu0 %980
        %v982 = vrcp.pop %v981
        %v983 = vmul.f32 %v978, %v982
        %v984 = vpack.c.bf16 %v983, %v983
        %985 = vrot.lane.b32.xlu0 %v683, 48
        %v986 = vpop.permute.xlu0 %985
        %v988 = vsel %vm623, %v984, 0
        %v991 = vsel %vm627, %v986, 0
        %993 = vmatprep.subr.bf16.mxu0 0
        %994 = vmatpush1.bf16.msra.mxu0 %v991
        %995 = vmatprep.subr.bf16.mxu0 0
        %996 = vmatpush1.bf16.msra.mxu0 0
        %997 = vmatprep.subr.bf16.mxu0 0
        %998 = vmatpush1.bf16.msra.mxu0 0
        %999 = vmatprep.subr.bf16.mxu0 0
        %1000 = vmatpush1.bf16.msra.mxu0 0
        %1001 = vmatprep.subr.bf16.mxu0 0
        %1002 = vmatpush1.bf16.msra.mxu0 0
        %1003 = vmatprep.subr.bf16.mxu0 0
        %1004 = vmatpush1.bf16.msra.mxu0 0
        %1005 = vmatprep.subr.bf16.mxu0 0
        %1006 = vmatpush1.bf16.msra.mxu0 0
        %1007 = vmatprep.subr.bf16.mxu0 0
        %1008 = vmatpush1.bf16.msra.mxu0 0
        %1009 = vmatprep.subr.bf16.mxu0 0
        %1010 = vmatpush1.bf16.msra.mxu0 0
        %1011 = vmatprep.subr.bf16.mxu0 0
        %1012 = vmatpush1.bf16.msra.mxu0 0
        %1013 = vmatprep.subr.bf16.mxu0 0
        %1014 = vmatpush1.bf16.msra.mxu0 0
        %1015 = vmatprep.subr.bf16.mxu0 0
        %1016 = vmatpush1.bf16.msra.mxu0 0
        %1017 = vmatprep.subr.bf16.mxu0 0
        %1018 = vmatpush1.bf16.msra.mxu0 0
        %1019 = vmatprep.subr.bf16.mxu0 0
        %1020 = vmatpush1.bf16.msra.mxu0 0
        %1021 = vmatprep.subr.bf16.mxu0 0
        %1022 = vmatpush1.bf16.msra.mxu0 0
        %1023 = vmatprep.subr.bf16.mxu0 0
        %1024 = vmatpush1.bf16.msra.mxu0 0
        %1025 = vmatprep.mubr.bf16.mxu0 0
        %1026 = vmatmul.mubr.bf16.gmra.mrb[0].mxu0 %v988
        %v1027 = vpop.f32.mrb[0].mxu0
        %v1028 = vadd.f32 0.0, %v1027
        %v1029 = vpop.f32.mrb[0].mxu0
        %v1030 = vpop.f32.mrb[0].mxu0
        %v1031 = vpop.f32.mrb[0].mxu0
        %1032 = vdwg.mxu0
        %1034 = vrot.lane.b32.xlu0 %v1028, 16
        %v1035 = vpop.permute.xlu0 %1034
        %vm1037 = vcmask 195712
        %1038 = vst.msk [vmem:[#allocation2] sm:$0xff] %vm1037, %v1035
        %1039 = vrot.lane.b32.xlu0 %v578, 72
        %v1040 = vpop.permute.xlu0 %1039
        %1042 = vxpose.xlu0.b32.start [1/16] %v1040, 128
        %1043 = vxpose.xlu0.b32.cont [2/16] 0.0, 128
        %1044 = vxpose.xlu0.b32.cont [3/16] 0.0, 128
        %1045 = vxpose.xlu0.b32.cont [4/16] 0.0, 128
        %1046 = vxpose.xlu0.b32.cont [5/16] 0.0, 128
        %1047 = vxpose.xlu0.b32.cont [6/16] 0.0, 128
        %1048 = vxpose.xlu0.b32.cont [7/16] 0.0, 128
        %1049 = vxpose.xlu0.b32.cont [8/16] 0.0, 128
        %1050 = vxpose.xlu0.b32.cont [9/16] 0.0, 128
        %1051 = vxpose.xlu0.b32.cont [10/16] 0.0, 128
        %1052 = vxpose.xlu0.b32.cont [11/16] 0.0, 128
        %1053 = vxpose.xlu0.b32.cont [12/16] 0.0, 128
        %1054 = vxpose.xlu0.b32.cont [13/16] 0.0, 128
        %1055 = vxpose.xlu0.b32.cont [14/16] 0.0, 128
        %1056 = vxpose.xlu0.b32.cont [15/16] 0.0, 128
        %1057 = vxpose.xlu0.b32.end [16/16] 0.0, 128
        %v1058 = vpop.trf.xlu0
        %v1059 = vpop.trf.xlu0
        %v1060 = vpop.trf.xlu0
        %v1061 = vpop.trf.xlu0
        %v1062 = vpop.trf.xlu0
        %v1063 = vpop.trf.xlu0
        %v1064 = vpop.trf.xlu0
        %v1065 = vpop.trf.xlu0
        %v1066 = vpop.trf.xlu0
        %v1067 = vpop.trf.xlu0
        %v1068 = vpop.trf.xlu0
        %v1069 = vpop.trf.xlu0
        %v1070 = vpop.trf.xlu0
        %v1071 = vpop.trf.xlu0
        %v1072 = vpop.trf.xlu0
        %v1073 = vpop.trf.xlu0
        %v1074 = vpack.c.bf16 %v1058, %v1058
        %s1075 = scalar_lea.vmem %s482, 24
        %v1076 = vld [vmem:[%s1075] sm:$0xff]
        %1077 = vrot.lane.b32.xlu0 %v584, 104
        %v1078 = vpop.permute.xlu0 %1077
        %v1080 = vsel %vm623, %v1078, 0
        %v1083 = vsel %vm627, %v1074, 0
        %1085 = vmatprep.subr.bf16.mxu0 0
        %1086 = vmatpush1.bf16.msra.mxu0 %v1083
        %1087 = vmatprep.subr.bf16.mxu0 0
        %1088 = vmatpush1.bf16.msra.mxu0 0
        %1089 = vmatprep.subr.bf16.mxu0 0
        %1090 = vmatpush1.bf16.msra.mxu0 0
        %1091 = vmatprep.subr.bf16.mxu0 0
        %1092 = vmatpush1.bf16.msra.mxu0 0
        %1093 = vmatprep.subr.bf16.mxu0 0
        %1094 = vmatpush1.bf16.msra.mxu0 0
        %1095 = vmatprep.subr.bf16.mxu0 0
        %1096 = vmatpush1.bf16.msra.mxu0 0
        %1097 = vmatprep.subr.bf16.mxu0 0
        %1098 = vmatpush1.bf16.msra.mxu0 0
        %1099 = vmatprep.subr.bf16.mxu0 0
        %1100 = vmatpush1.bf16.msra.mxu0 0
        %1101 = vmatprep.subr.bf16.mxu0 0
        %1102 = vmatpush1.bf16.msra.mxu0 0
        %1103 = vmatprep.subr.bf16.mxu0 0
        %1104 = vmatpush1.bf16.msra.mxu0 0
        %1105 = vmatprep.subr.bf16.mxu0 0
        %1106 = vmatpush1.bf16.msra.mxu0 0
        %1107 = vmatprep.subr.bf16.mxu0 0
        %1108 = vmatpush1.bf16.msra.mxu0 0
        %1109 = vmatprep.subr.bf16.mxu0 0
        %1110 = vmatpush1.bf16.msra.mxu0 0
        %1111 = vmatprep.subr.bf16.mxu0 0
        %1112 = vmatpush1.bf16.msra.mxu0 0
        %1113 = vmatprep.subr.bf16.mxu0 0
        %1114 = vmatpush1.bf16.msra.mxu0 0
        %1115 = vmatprep.subr.bf16.mxu0 0
        %1116 = vmatpush1.bf16.msra.mxu0 0
        %1117 = vmatprep.mubr.bf16.mxu0 0
        %1118 = vmatmul.mubr.bf16.gmra.mrb[0].mxu0 %v1080
        %v1119 = vpop.f32.mrb[0].mxu0
        %v1120 = vadd.f32 %v1076, %v1119
        %v1121 = vpop.f32.mrb[0].mxu0
        %v1122 = vpop.f32.mrb[0].mxu0
        %v1123 = vpop.f32.mrb[0].mxu0
        %1124 = vdwg.mxu0
        %v1125 = vsel %vm623, %v1120, -inf
        %1126 = vmax.xlane.f32.xlu0 %v1125
        %v1127 = vpop.xlane.xlu0 %1126
        %v1128 = vsub.f32 %v1120, %v1127
        %v1129 = vmul.f32 %v1128, 1.442695
        %v1130 = vpow.pop %v1129
        %v1131 = vsel %vm623, %v1130, 0.0
        %1132 = vadd.xlane.f32.xlu0 %v1131
        %v1133 = vpop.xlane.xlu0 %1132
        %v1134 = vrcp.pop %v1133
        %v1135 = vmul.f32 %v1130, %v1134
        %v1136 = vpack.c.bf16 %v1135, %v1135
        %1137 = vrot.lane.b32.xlu0 %v683, 40
        %v1138 = vpop.permute.xlu0 %1137
        %v1140 = vsel %vm623, %v1136, 0
        %v1143 = vsel %vm627, %v1138, 0
        %1145 = vmatprep.subr.bf16.mxu0 0
        %1146 = vmatpush1.bf16.msra.mxu0 %v1143
        %1147 = vmatprep.subr.bf16.mxu0 0
        %1148 = vmatpush1.bf16.msra.mxu0 0
        %1149 = vmatprep.subr.bf16.mxu0 0
        %1150 = vmatpush1.bf16.msra.mxu0 0
        %1151 = vmatprep.subr.bf16.mxu0 0
        %1152 = vmatpush1.bf16.msra.mxu0 0
        %1153 = vmatprep.subr.bf16.mxu0 0
        %1154 = vmatpush1.bf16.msra.mxu0 0
        %1155 = vmatprep.subr.bf16.mxu0 0
        %1156 = vmatpush1.bf16.msra.mxu0 0
        %1157 = vmatprep.subr.bf16.mxu0 0
        %1158 = vmatpush1.bf16.msra.mxu0 0
        %1159 = vmatprep.subr.bf16.mxu0 0
        %1160 = vmatpush1.bf16.msra.mxu0 0
        %1161 = vmatprep.subr.bf16.mxu0 0
        %1162 = vmatpush1.bf16.msra.mxu0 0
        %1163 = vmatprep.subr.bf16.mxu0 0
        %1164 = vmatpush1.bf16.msra.mxu0 0
        %1165 = vmatprep.subr.bf16.mxu0 0
        %1166 = vmatpush1.bf16.msra.mxu0 0
        %1167 = vmatprep.subr.bf16.mxu0 0
        %1168 = vmatpush1.bf16.msra.mxu0 0
        %1169 = vmatprep.subr.bf16.mxu0 0
        %1170 = vmatpush1.bf16.msra.mxu0 0
        %1171 = vmatprep.subr.bf16.mxu0 0
        %1172 = vmatpush1.bf16.msra.mxu0 0
        %1173 = vmatprep.subr.bf16.mxu0 0
        %1174 = vmatpush1.bf16.msra.mxu0 0
        %1175 = vmatprep.subr.bf16.mxu0 0
        %1176 = vmatpush1.bf16.msra.mxu0 0
        %1177 = vmatprep.mubr.bf16.mxu0 0
        %1178 = vmatmul.mubr.bf16.gmra.mrb[0].mxu0 %v1140
        %v1179 = vpop.f32.mrb[0].mxu0
        %v1180 = vadd.f32 0.0, %v1179
        %v1181 = vpop.f32.mrb[0].mxu0
        %v1182 = vpop.f32.mrb[0].mxu0
        %v1183 = vpop.f32.mrb[0].mxu0
        %1184 = vdwg.mxu0
        %1186 = vrot.lane.b32.xlu0 %v1180, 24
        %v1187 = vpop.permute.xlu0 %1186
        %vm1189 = vcmask 261312
        %1190 = vst.msk [vmem:[#allocation2] sm:$0xff] %vm1189, %v1187
        %v1191 = vld [vmem:[#allocation2] sm:$0xff]
        %v1192 = vpack.c.bf16 %v1191, %v1191
        %v1193 = vld [vmem:[%s4] sm:$0xf]
        %v1194 = vld [vmem:[%s4 + $0x4] sm:$0xf]
        %v1195 = vld [vmem:[%s4 + $0x8] sm:$0xf]
        %v1196 = vld [vmem:[%s4 + $0xc] sm:$0xf]
        %v1197 = vld [vmem:[%s5] sm:$0x1]
        %v1199 = vlaneseq
        %v1200 = vshrl.u32 %v1199, 7
        %v1201 = vsub.s32 0, %v1200
        %v1202 = vrot.slane %v1197, %v1201
        %v1208 = vunpack.c.l.b16 %v1193
        %v1209 = vunpack.c.l.b16 %v1194
        %v1210 = vunpack.c.l.b16 %v1195
        %v1211 = vunpack.c.l.b16 %v1196
        %v1212 = vpack.c.b16 %v1209, %v1208
        %v1213 = vpack.c.b16 %v1211, %v1210
        %v1217 = vsel %vm487, %v1192, 0
        %1219 = vmatprep.subr.bf16.mxu0 0
        %1220 = vmatpush1.bf16.msra.mxu0 %v1212
        %1221 = vmatprep.subr.bf16.mxu0 0
        %1222 = vmatpush1.bf16.msra.mxu0 %v1213
        %1223 = vmatprep.subr.bf16.mxu0 0
        %1224 = vmatpush1.bf16.msra.mxu0 0
        %1225 = vmatprep.subr.bf16.mxu0 0
        %1226 = vmatpush1.bf16.msra.mxu0 0
        %1227 = vmatprep.subr.bf16.mxu0 0
        %1228 = vmatpush1.bf16.msra.mxu0 0
        %1229 = vmatprep.subr.bf16.mxu0 0
        %1230 = vmatpush1.bf16.msra.mxu0 0
        %1231 = vmatprep.subr.bf16.mxu0 0
        %1232 = vmatpush1.bf16.msra.mxu0 0
        %1233 = vmatprep.subr.bf16.mxu0 0
        %1234 = vmatpush1.bf16.msra.mxu0 0
        %1235 = vmatprep.subr.bf16.mxu0 0
        %1236 = vmatpush1.bf16.msra.mxu0 0
        %1237 = vmatprep.subr.bf16.mxu0 0
        %1238 = vmatpush1.bf16.msra.mxu0 0
        %1239 = vmatprep.subr.bf16.mxu0 0
        %1240 = vmatpush1.bf16.msra.mxu0 0
        %1241 = vmatprep.subr.bf16.mxu0 0
        %1242 = vmatpush1.bf16.msra.mxu0 0
        %1243 = vmatprep.subr.bf16.mxu0 0
        %1244 = vmatpush1.bf16.msra.mxu0 0
        %1245 = vmatprep.subr.bf16.mxu0 0
        %1246 = vmatpush1.bf16.msra.mxu0 0
        %1247 = vmatprep.subr.bf16.mxu0 0
        %1248 = vmatpush1.bf16.msra.mxu0 0
        %1249 = vmatprep.subr.bf16.mxu0 0
        %1250 = vmatpush1.bf16.msra.mxu0 0
        %1251 = vmatprep.mubr.bf16.mxu0 0
        %1252 = vmatmul.mubr.bf16.gmra.mrb[0].mxu0 %v1217
        %v1253 = vpop.f32.mrb[0].mxu0
        %v1254 = vadd.f32 %v1202, %v1253
        %v1255 = vpop.f32.mrb[0].mxu0
        %v1256 = vpop.f32.mrb[0].mxu0
        %v1257 = vpop.f32.mrb[0].mxu0
        %1258 = vdwg.mxu0
        %v1259 = vadd.f32 %v484, %v1254
        %v1260 = vld [vmem:[%s12] sm:$0x1]
        %v1261 = vld [vmem:[%s13] sm:$0x1]
        %v1262 = vsel %vm487, %v1259, 0.0
        %1263 = vadd.xlane.f32.xlu0 %v1262
        %v1264 = vpop.xlane.xlu0 %1263
        %v1265 = vmul.f32 %v1264, %v491
        %v1266 = vsub.f32 %v1259, %v1265
        %v1267 = vmul.f32 %v1266, %v1266
        %v1268 = vsel %vm487, %v1267, 0.0
        %1269 = vadd.xlane.f32.xlu0 %v1268
        %v1270 = vpop.xlane.xlu0 %1269
        %v1271 = vmul.f32 %v1270, %v491
        %v1272 = vadd.f32 %v1271, 1e-06
        %v1273 = vrsqrt.pop %v1272
        %v1274 = vmul.f32 %v1266, %v1273
        %v1276 = vlaneseq
        %v1277 = vshrl.u32 %v1276, 7
        %v1278 = vsub.s32 0, %v1277
        %v1279 = vrot.slane %v1260, %v1278
        %v1281 = vmul.f32 %v1274, %v1279
        %v1283 = vlaneseq
        %v1284 = vshrl.u32 %v1283, 7
        %v1285 = vsub.s32 0, %v1284
        %v1286 = vrot.slane %v1261, %v1285
        %v1288 = vadd.f32 %v1281, %v1286
        %v1289 = vpack.c.bf16 %v1288, %v1288
        %v1290 = vld [vmem:[%s8] sm:$0xf]
        %v1291 = vld [vmem:[%s8 + $0x4] sm:$0xf]
        %v1292 = vld [vmem:[%s8 + $0x8] sm:$0xf]
        %v1293 = vld [vmem:[%s8 + $0xc] sm:$0xf]
        %v1294 = vld [vmem:[%s9] sm:$0x1]
        %v1296 = vlaneseq
        %v1297 = vshrl.u32 %v1296, 7
        %v1298 = vsub.s32 0, %v1297
        %v1299 = vrot.slane %v1294, %v1298
        %v1305 = vunpack.c.l.b16 %v1290
        %v1306 = vunpack.c.l.b16 %v1291
        %v1307 = vunpack.c.l.b16 %v1292
        %v1308 = vunpack.c.l.b16 %v1293
        %v1309 = vpack.c.b16 %v1306, %v1305
        %v1310 = vpack.c.b16 %v1308, %v1307
        %v1314 = vsel %vm487, %v1289, 0
        %1316 = vmatprep.subr.bf16.mxu0 0
        %1317 = vmatpush1.bf16.msra.mxu0 %v1309
        %1318 = vmatprep.subr.bf16.mxu0 0
        %1319 = vmatpush1.bf16.msra.mxu0 %v1310
        %1320 = vmatprep.subr.bf16.mxu0 0
        %1321 = vmatpush1.bf16.msra.mxu0 0
        %1322 = vmatprep.subr.bf16.mxu0 0
        %1323 = vmatpush1.bf16.msra.mxu0 0
        %1324 = vmatprep.subr.bf16.mxu0 0
        %1325 = vmatpush1.bf16.msra.mxu0 0
        %1326 = vmatprep.subr.bf16.mxu0 0
        %1327 = vmatpush1.bf16.msra.mxu0 0
        %1328 = vmatprep.subr.bf16.mxu0 0
        %1329 = vmatpush1.bf16.msra.mxu0 0
        %1330 = vmatprep.subr.bf16.mxu0 0
        %1331 = vmatpush1.bf16.msra.mxu0 0
        %1332 = vmatprep.subr.bf16.mxu0 0
        %1333 = vmatpush1.bf16.msra.mxu0 0
        %1334 = vmatprep.subr.bf16.mxu0 0
        %1335 = vmatpush1.bf16.msra.mxu0 0
        %1336 = vmatprep.subr.bf16.mxu0 0
        %1337 = vmatpush1.bf16.msra.mxu0 0
        %1338 = vmatprep.subr.bf16.mxu0 0
        %1339 = vmatpush1.bf16.msra.mxu0 0
        %1340 = vmatprep.subr.bf16.mxu0 0
        %1341 = vmatpush1.bf16.msra.mxu0 0
        %1342 = vmatprep.subr.bf16.mxu0 0
        %1343 = vmatpush1.bf16.msra.mxu0 0
        %1344 = vmatprep.subr.bf16.mxu0 0
        %1345 = vmatpush1.bf16.msra.mxu0 0
        %1346 = vmatprep.subr.bf16.mxu0 0
        %1347 = vmatpush1.bf16.msra.mxu0 0
        %1348 = vmatprep.mubr.bf16.mxu0 0
        %1349 = vmatmul.mubr.bf16.gmra.mrb[0].mxu0 %v1314
        %v1350 = vpop.f32.mrb[0].mxu0
        %v1351 = vadd.f32 %v1299, %v1350
        %v1352 = vpop.f32.mrb[0].mxu0
        %v1353 = vpop.f32.mrb[0].mxu0
        %v1354 = vpop.f32.mrb[0].mxu0
        %1355 = vdwg.mxu0
        %v1356 = vmax.f32 %v1351, 0.0
        %v1357 = vpack.c.bf16 %v1356, %v1356
        %v1358 = vld [vmem:[%s10] sm:$0xf]
        %v1359 = vld [vmem:[%s10 + $0x4] sm:$0xf]
        %v1360 = vld [vmem:[%s10 + $0x8] sm:$0xf]
        %v1361 = vld [vmem:[%s10 + $0xc] sm:$0xf]
        %v1362 = vld [vmem:[%s10 + $0x10] sm:$0xf]
        %v1363 = vld [vmem:[%s10 + $0x14] sm:$0xf]
        %v1364 = vld [vmem:[%s10 + $0x18] sm:$0xf]
        %v1365 = vld [vmem:[%s10 + $0x1c] sm:$0xf]
        %v1366 = vld [vmem:[%s11] sm:$0x1]
        %v1368 = vlaneseq
        %v1369 = vshrl.u32 %v1368, 7
        %v1370 = vsub.s32 0, %v1369
        %v1371 = vrot.slane %v1366, %v1370
        %v1381 = vunpack.c.l.b16 %v1358
        %v1382 = vunpack.c.l.b16 %v1359
        %v1383 = vunpack.c.l.b16 %v1360
        %v1384 = vunpack.c.l.b16 %v1361
        %v1385 = vunpack.c.l.b16 %v1362
        %v1386 = vunpack.c.l.b16 %v1363
        %v1387 = vunpack.c.l.b16 %v1364
        %v1388 = vunpack.c.l.b16 %v1365
        %v1389 = vpack.c.b16 %v1382, %v1381
        %v1390 = vpack.c.b16 %v1384, %v1383
        %v1391 = vpack.c.b16 %v1386, %v1385
        %v1392 = vpack.c.b16 %v1388, %v1387
        %vm1397 = vcmask 523264
        %v1399 = vsel %vm1397, %v1357, 0
        %1401 = vmatprep.subr.bf16.mxu0 0
        %1402 = vmatpush1.bf16.msra.mxu0 %v1389
        %1403 = vmatprep.subr.bf16.mxu0 0
        %1404 = vmatpush1.bf16.msra.mxu0 %v1390
        %1405 = vmatprep.subr.bf16.mxu0 0
        %1406 = vmatpush1.bf16.msra.mxu0 %v1391
        %1407 = vmatprep.subr.bf16.mxu0 0
        %1408 = vmatpush1.bf16.msra.mxu0 %v1392
        %1409 = vmatprep.subr.bf16.mxu0 0
        %1410 = vmatpush1.bf16.msra.mxu0 0
        %1411 = vmatprep.subr.bf16.mxu0 0
        %1412 = vmatpush1.bf16.msra.mxu0 0
        %1413 = vmatprep.subr.bf16.mxu0 0
        %1414 = vmatpush1.bf16.msra.mxu0 0
        %1415 = vmatprep.subr.bf16.mxu0 0
        %1416 = vmatpush1.bf16.msra.mxu0 0
        %1417 = vmatprep.subr.bf16.mxu0 0
        %1418 = vmatpush1.bf16.msra.mxu0 0
        %1419 = vmatprep.subr.bf16.mxu0 0
        %1420 = vmatpush1.bf16.msra.mxu0 0
        %1421 = vmatprep.subr.bf16.mxu0 0
        %1422 = vmatpush1.bf16.msra.mxu0 0
        %1423 = vmatprep.subr.bf16.mxu0 0
        %1424 = vmatpush1.bf16.msra.mxu0 0
        %1425 = vmatprep.subr.bf16.mxu0 0
        %1426 = vmatpush1.bf16.msra.mxu0 0
        %1427 = vmatprep.subr.bf16.mxu0 0
        %1428 = vmatpush1.bf16.msra.mxu0 0
        %1429 = vmatprep.subr.bf16.mxu0 0
        %1430 = vmatpush1.bf16.msra.mxu0 0
        %1431 = vmatprep.subr.bf16.mxu0 0
        %1432 = vmatpush1.bf16.msra.mxu0 0
        %1433 = vmatprep.mubr.bf16.mxu0 0
        %1434 = vmatmul.mubr.bf16.gmra.mrb[0].mxu0 %v1399
        %v1435 = vpop.f32.mrb[0].mxu0
        %v1436 = vadd.f32 %v1371, %v1435
        %v1437 = vpop.f32.mrb[0].mxu0
        %v1438 = vpop.f32.mrb[0].mxu0
        %v1439 = vpop.f32.mrb[0].mxu0
        %1440 = vdwg.mxu0
        %v1441 = vadd.f32 %v1259, %v1436
        %1442 = vst.msk [vmem:[%s473] sm:$0xff] %vm487, %v1441
        %s1443 = sand.u32 %s340, 1
        %s1444 = scalar_lea.sflag [#allocation4], %s1443
        %s1445 = sand.u32 %s340, 1
        %s1446 = smul.addr %s1445, 8
        %s1447 = scalar_lea.vmem [#allocation3], %s1446
        // Predicated region
        $region77: #{transformer_layer.1} parent=75 // pred_check
          %p1448 = pneg %p350
        $region78: #{transformer_layer.1} parent=75 // pred_check_branch
          %1450 = sbr.rel (%p1448) target = $region80
        $region79: #{transformer_layer.1} parent=75 // pred_region
          %s1452 = ssub.s32 128, 128
          %1453 = vsyncadd %s1444, %s1452
          %s1454 = smul.addr %s28, 128
          %s1455 = scalar_lea.hbm %s14, %s1454
          %s1457 = sshll.u32 %s1447, 4
          %s1458 = int_to_ptr.vmem [resolvable:$true] %s1457
          %1460 = dma.vmem_to_hbm [thread:$0]  %s1458, 128, %s1455, %s1444
        $region80: #{transformer_layer.1} parent=75 // pred_fallthru
          _
      $region76: #{transformer_layer.1} parent=5 // pred_fallthru
        _
      %p1461 = scmp.le.s32.totalorder 2, %s23
      // Predicated region
      $region81: #{transformer_layer.1} parent=5 // pred_check
        %p1462 = pneg %p1461
      $region82: #{transformer_layer.1} parent=5 // pred_check_branch
        %1464 = sbr.rel (%p1462) target = $region84
      $region83: #{transformer_layer.1} parent=5 // pred_region
        %s1465 = ssub.s32 %s23, 2
        // Predicated region
        $region85: #{transformer_layer.1} parent=83 // pred_check
          %p1466 = pneg %p356
        $region86: #{transformer_layer.1} parent=83 // pred_check_branch
          %1468 = sbr.rel (%p1466) target = $region88
        $region87: #{transformer_layer.1} parent=83 // pred_region
          %s1469 = sand.u32 %s341, 1
          %s1470 = scalar_lea.sflag [#allocation4], %s1469
          %s1471 = sand.u32 %s341, 1
          %s1472 = smul.addr %s1471, 8
          %s1473 = scalar_lea.vmem [#allocation3], %s1472
          %1474 = dma.done %s1470, 128
        $region88: #{transformer_layer.1} parent=83 // pred_fallthru
          _
      $region84: #{transformer_layer.1} parent=5 // pred_fallthru
        _
    $region6: #{transformer_layer.1} parent=1 // loop_footer
      %s27 = sadd.s32 1, %s23
    $region7: #{transformer_layer.1} parent=1 // loop_footer_branch
      %22 = sbr.rel target = $region3
    $region8: #{transformer_layer.1} parent=1 // loop_exit
      _
    %1475 = vsyncpa [#allocation4], 1
    %s1476 = scalar_lea.sflag [#allocation4], 1
    %1477 = vsyncpa %s1476, 1

</llo_original>
